<compile_context>
chip_gen: v7x
topology: tpu7x:2x2x1
jax: 0.10.0
libtpu: 0.0.40
codegen_flags: <defaults>
</compile_context>

<pallas_src>
import functools
import math

import jax
import jax.numpy as jnp
from jax.experimental import pallas as pl
from jax.experimental.pallas import tpu as pltpu


# ----------------------------- helpers ---------------------------------------

def _layernorm(x, gamma, beta, eps=1e-5):
    # PyTorch nn.LayerNorm semantics: biased variance over last dim, eps in sqrt.
    mean = jnp.mean(x, axis=-1, keepdims=True)
    var = jnp.mean((x - mean) ** 2, axis=-1, keepdims=True)
    return (x - mean) * jax.lax.rsqrt(var + eps) * gamma + beta


def _vmem_limit_bytes():
    # Generation-aware scoped-VMEM budget: ~48 MiB on v7x (64 MiB physical),
    # up to 112 MiB on v5e/v6e (128 MiB physical).
    cap = 64 * 1024 * 1024
    try:
        cap = int(pltpu.get_tpu_info().vmem_capacity_bytes)
    except Exception:
        pass
    return int(max(32 * 1024 * 1024,
                   min(cap - 16 * 1024 * 1024, 112 * 1024 * 1024)))


def _weight_spec(shape, single_buffer):
    # Grid-invariant weight: constant index_map; optionally single-buffered so
    # it is resident once instead of double-buffered.
    idx = lambda *_, nd=len(shape): (0,) * nd
    if single_buffer:
        return pl.BlockSpec(shape, idx, pipeline_mode=pl.Buffered(buffer_count=1))
    return pl.BlockSpec(shape, idx)


# ----------------------------- kernels ----------------------------------------

def _qkv_proj_kernel(hd, scale, x_ref, w_ref, b_ref, q_ref, k_ref, v_ref):
    """Fused Q|K|V projection: one (Ts,D)x(D,3*hd) matmul, bias, Q pre-scaled."""
    f32, bf16 = jnp.float32, jnp.bfloat16
    x = x_ref[...].astype(bf16)
    y = jnp.dot(x, w_ref[...], preferred_element_type=f32) + b_ref[...]
    q_ref[...] = (y[:, :hd] * scale).astype(q_ref.dtype)
    k_ref[...] = y[:, hd:2 * hd].astype(k_ref.dtype)
    v_ref[...] = y[:, 2 * hd:3 * hd].astype(v_ref.dtype)


def _flash_attn_kernel(q_ref, k_ref, v_ref, o_ref, m_sc, l_sc, acc_sc):
    """Online-softmax attention. q_ref: (h,Tq,d_k), k_ref: (h,d_k,Tkv),
    v_ref: (h,Tkv,d_k) (all bf16, Q pre-scaled). Output: packed (Tq, h*d_k)."""
    f32, bf16 = jnp.float32, jnp.bfloat16
    h, _, d_k = acc_sc.shape
    ki = pl.program_id(2)

    @pl.when(ki == 0)
    def _init():
        m_sc[...] = jnp.full(m_sc.shape, -jnp.inf, dtype=f32)
        l_sc[...] = jnp.zeros(l_sc.shape, dtype=f32)
        acc_sc[...] = jnp.zeros(acc_sc.shape, dtype=f32)

    # Scores: batched (head-leading) matmul, last-of-LHS x first-of-RHS.
    s = jnp.einsum('hqd,hdk->hqk', q_ref[...], k_ref[...],
                   preferred_element_type=f32)
    m_prev = m_sc[...]
    m_new = jnp.maximum(m_prev, jnp.max(s, axis=-1, keepdims=True))
    alpha = jnp.exp(m_prev - m_new)
    p = jnp.exp(s - m_new)
    l_sc[...] = alpha * l_sc[...] + jnp.sum(p, axis=-1, keepdims=True)
    acc_sc[...] = alpha * acc_sc[...] + jnp.einsum(
        'hqk,hkd->hqd', p.astype(bf16), v_ref[...], preferred_element_type=f32)
    m_sc[...] = m_new

    @pl.when(ki == pl.num_programs(2) - 1)
    def _finalize():
        ctx = acc_sc[...] * pl.reciprocal(l_sc[...], approx=True)   # (h,Tq,d_k)
        # Head-merge once per q tile into the lane-dense packed bf16 output.
        for i in range(h):
            o_ref[:, i * d_k:(i + 1) * d_k] = ctx[i].astype(o_ref.dtype)


def _epilogue_kernel(x_ref, ctx_ref, wo_ref, bo_ref, w1_ref, b1_ref,
                     w2_ref, b2_ref, g1_ref, be1_ref, g2_ref, be2_ref, out_ref):
    """Output projection + residual + LN1 + FFN(ReLU) + residual + LN2."""
    f32, bf16 = jnp.float32, jnp.bfloat16
    attn = jnp.dot(ctx_ref[...].astype(bf16), wo_ref[...],
                   preferred_element_type=f32) + bo_ref[...]
    x1 = _layernorm(x_ref[...].astype(f32) + attn, g1_ref[...], be1_ref[...])
    h1 = jnp.maximum(
        jnp.dot(x1.astype(bf16), w1_ref[...], preferred_element_type=f32)
        + b1_ref[...], 0.0)
    ffn = jnp.dot(h1.astype(bf16), w2_ref[...],
                  preferred_element_type=f32) + b2_ref[...]
    out_ref[...] = _layernorm(x1 + ffn, g2_ref[...],
                              be2_ref[...]).astype(out_ref.dtype)


# ----------------------------- wrapper -----------------------------------------

def _encoder_layer_impl(x, params, *, h, d_k, block_q, block_kv, block_s,
                        single_buffer_weights):
    B, S, D = x.shape
    hd = h * d_k
    f32, bf16 = jnp.float32, jnp.bfloat16

    block_q = min(block_q, S)
    block_kv = min(block_kv, S)
    block_s = min(block_s, S)
    assert S % block_q == 0 and S % block_kv == 0 and S % block_s == 0, \
        "S must divide the tile sizes"
    # K^T tile has block_kv on the lane axis -> keep it lane-dense.
    assert block_kv % 128 == 0 or block_kv == S
    n_q, n_kv, n_s = S // block_q, S // block_kv, S // block_s

    vmem_limit = _vmem_limit_bytes()
    scale = 1.0 / math.sqrt(d_k)

    # ---------------- kernel 1: fused QKV projection (once per token) --------
    w_qkv = jnp.concatenate([params['wq'], params['wk'], params['wv']],
                            axis=1).astype(bf16)            # (D, 3*hd)
    b_qkv = jnp.concatenate([params['bq'], params['bk'], params['bv']],
                            axis=1).astype(f32)             # (1, 3*hd)

    q, k, v = pl.pallas_call(
        functools.partial(_qkv_proj_kernel, hd, scale),
        out_shape=tuple(jax.ShapeDtypeStruct((B, S, hd), bf16) for _ in range(3)),
        grid=(B, n_s),
        in_specs=[
            pl.BlockSpec((None, block_s, D), lambda b, i: (b, i, 0)),
            _weight_spec(w_qkv.shape, single_buffer_weights),
            _weight_spec(b_qkv.shape, single_buffer_weights),
        ],
        out_specs=tuple(pl.BlockSpec((None, block_s, hd), lambda b, i: (b, i, 0))
                        for _ in range(3)),
        compiler_params=pltpu.CompilerParams(
            dimension_semantics=("parallel", "parallel"),
            vmem_limit_bytes=vmem_limit),
    )(x, w_qkv, b_qkv)

    # ---------------- layout plumbing in XLA (outside Pallas) ----------------
    # Head split done once here instead of per (q-tile, kv-tile) in the kernel.
    q_hm = q.reshape(B, S, h, d_k).transpose(0, 2, 1, 3)    # (B, h, S, d_k)
    k_t = k.reshape(B, S, h, d_k).transpose(0, 2, 3, 1)     # (B, h, d_k, S)
    v_hm = v.reshape(B, S, h, d_k).transpose(0, 2, 1, 3)    # (B, h, S, d_k)

    # ---------------- kernel 2: flash attention ------------------------------
    ctx = pl.pallas_call(
        _flash_attn_kernel,
        out_shape=jax.ShapeDtypeStruct((B, S, hd), bf16),
        grid=(B, n_q, n_kv),
        in_specs=[
            pl.BlockSpec((None, h, block_q, d_k), lambda b, qi, ki: (b, 0, qi, 0)),
            pl.BlockSpec((None, h, d_k, block_kv), lambda b, qi, ki: (b, 0, 0, ki)),
            pl.BlockSpec((None, h, block_kv, d_k), lambda b, qi, ki: (b, 0, ki, 0)),
        ],
        out_specs=pl.BlockSpec((None, block_q, hd), lambda b, qi, ki: (b, qi, 0)),
        scratch_shapes=[
            pltpu.VMEM((h, block_q, 1), f32),    # running max
            pltpu.VMEM((h, block_q, 1), f32),    # running denominator
            pltpu.VMEM((h, block_q, d_k), f32),  # output accumulator
        ],
        compiler_params=pltpu.CompilerParams(
            dimension_semantics=("parallel", "parallel", "arbitrary"),
            vmem_limit_bytes=vmem_limit),
    )(q_hm, k_t, v_hm)

    # ---------------- kernel 3: epilogue (wo + LN1 + FFN + LN2) ---------------
    weights = [
        params['wo'].astype(bf16), params['bo'].astype(f32),
        params['w1'].astype(bf16), params['b1'].astype(f32),
        params['w2'].astype(bf16), params['b2'].astype(f32),
        params['g1'].astype(f32), params['be1'].astype(f32),
        params['g2'].astype(f32), params['be2'].astype(f32),
    ]
    epi_specs = [
        pl.BlockSpec((None, block_s, D), lambda b, i: (b, i, 0)),
        pl.BlockSpec((None, block_s, hd), lambda b, i: (b, i, 0)),
    ] + [_weight_spec(w.shape, single_buffer_weights) for w in weights]

    out = pl.pallas_call(
        _epilogue_kernel,
        out_shape=jax.ShapeDtypeStruct((B, S, D), x.dtype),
        grid=(B, n_s),
        in_specs=epi_specs,
        out_specs=pl.BlockSpec((None, block_s, D), lambda b, i: (b, i, 0)),
        compiler_params=pltpu.CompilerParams(
            dimension_semantics=("parallel", "parallel"),
            vmem_limit_bytes=vmem_limit),
    )(x, ctx, *weights)
    return out


def encoder_layer(x, params, *, h, d_k, block_q=256, block_kv=256, block_s=256):
    kwargs = dict(h=h, d_k=d_k, block_q=block_q, block_kv=block_kv,
                  block_s=block_s)
    try:
        return _encoder_layer_impl(x, params, **kwargs,
                                   single_buffer_weights=True)
    except Exception:
        # Fallback for jax versions without BlockSpec.pipeline_mode/pl.Buffered.
        return _encoder_layer_impl(x, params, **kwargs,
                                   single_buffer_weights=False)


# ----------------------------- references ---------------------------------------

def _reference_f32(x, params, *, h, d_k):
    """Pure-f32 reference of the post-LN encoder layer (module semantics)."""
    B, S, _ = x.shape
    q = x @ params['wq'] + params['bq']
    k = x @ params['wk'] + params['bk']
    v = x @ params['wv'] + params['bv']
    qh = q.reshape(B, S, h, d_k).transpose(0, 2, 1, 3)
    kh = k.reshape(B, S, h, d_k).transpose(0, 2, 1, 3)
    vh = v.reshape(B, S, h, d_k).transpose(0, 2, 1, 3)
    s = jnp.einsum('bhqd,bhkd->bhqk', qh, kh) / math.sqrt(d_k)
    p = jax.nn.softmax(s, axis=-1)
    o = jnp.einsum('bhqk,bhkd->bhqd', p, vh).transpose(0, 2, 1, 3).reshape(B, S, -1)
    attn = o @ params['wo'] + params['bo']
    x1 = _layernorm(x + attn, params['g1'], params['be1'])
    f = jnp.maximum(x1 @ params['w1'] + params['b1'], 0.0) @ params['w2'] + params['b2']
    return _layernorm(x1 + f, params['g2'], params['be2'])


def _reference_bf16(x, params, *, h, d_k):
    """Reference mirroring the kernel's bf16-operand / f32-accumulate order."""
    bf, f32 = jnp.bfloat16, jnp.float32

    def mm(a, w):
        return jnp.dot(a.astype(bf), w.astype(bf), preferred_element_type=f32)

    B, S, _ = x.shape
    scale = 1.0 / math.sqrt(d_k)
    q = (mm(x, params['wq']) + params['bq']) * scale
    k = mm(x, params['wk']) + params['bk']
    v = mm(x, params['wv']) + params['bv']
    qh = q.reshape(B, S, h, d_k).transpose(0, 2, 1, 3).astype(bf)
    kh = k.reshape(B, S, h, d_k).transpose(0, 2, 1, 3).astype(bf)
    vh = v.reshape(B, S, h, d_k).transpose(0, 2, 1, 3).astype(bf)
    s = jnp.einsum('bhqd,bhkd->bhqk', qh, kh, preferred_element_type=f32)
    p = jnp.exp(s - jnp.max(s, axis=-1, keepdims=True))
    l = jnp.sum(p, axis=-1, keepdims=True)
    o = jnp.einsum('bhqk,bhkd->bhqd', p.astype(bf), vh,
                   preferred_element_type=f32) / l
    ctx = o.transpose(0, 2, 1, 3).reshape(B, S, h * d_k)
    attn = mm(ctx, params['wo']) + params['bo']
    x1 = _layernorm(x + attn, params['g1'], params['be1'])
    h1 = jnp.maximum(mm(x1, params['w1']) + params['b1'], 0.0)
    f = mm(h1, params['w2']) + params['b2']
    return _layernorm(x1 + f, params['g2'], params['be2'])


def init_params(key, d, h, d_k, d_ff):
    ks = jax.random.split(key, 16)
    s = 0.05
    hd = h * d_k
    f32 = jnp.float32
    return {
        'wq': s * jax.random.normal(ks[0], (d, hd), f32),
        'bq': 0.02 * jax.random.normal(ks[1], (1, hd), f32),
        'wk': s * jax.random.normal(ks[2], (d, hd), f32),
        'bk': 0.02 * jax.random.normal(ks[3], (1, hd), f32),
        'wv': s * jax.random.normal(ks[4], (d, hd), f32),
        'bv': 0.02 * jax.random.normal(ks[5], (1, hd), f32),
        'wo': s * jax.random.normal(ks[6], (hd, d), f32),
        'bo': 0.02 * jax.random.normal(ks[7], (1, d), f32),
        'w1': s * jax.random.normal(ks[8], (d, d_ff), f32),
        'b1': 0.02 * jax.random.normal(ks[9], (1, d_ff), f32),
        'w2': s * jax.random.normal(ks[10], (d_ff, d), f32),
        'b2': 0.02 * jax.random.normal(ks[11], (1, d), f32),
        'g1': 1.0 + 0.1 * jax.random.normal(ks[12], (1, d), f32),
        'be1': 0.05 * jax.random.normal(ks[13], (1, d), f32),
        'g2': 1.0 + 0.1 * jax.random.normal(ks[14], (1, d), f32),
        'be2': 0.05 * jax.random.normal(ks[15], (1, d), f32),
    }


if __name__ == "__main__":
    B, S = 2, 256
    h, d, d_k, d_ff = 4, 128, 32, 256      # lane-dense dims (multiples of 128)

    key = jax.random.PRNGKey(0)
    kx, kp = jax.random.split(key)
    x = jax.random.normal(kx, (B, S, d), jnp.float32)
    params = init_params(kp, d, h, d_k, d_ff)

    refbf = jax.block_until_ready(_reference_bf16(x, params, h=h, d_k=d_k))
    ref32 = jax.block_until_ready(_reference_f32(x, params, h=h, d_k=d_k))

    # Config 1: whole sequence in a single q/kv tile.
    out1 = jax.block_until_ready(
        encoder_layer(x, params, h=h, d_k=d_k,
                      block_q=256, block_kv=256, block_s=256))
    # Config 2: 2x2 q/kv tiles -> exercises the online-softmax accumulator.
    out2 = jax.block_until_ready(
        encoder_layer(x, params, h=h, d_k=d_k,
                      block_q=128, block_kv=128, block_s=128))

    for out in (out1, out2):
        assert out.shape == (B, S, d)
        assert bool(jnp.all(jnp.isfinite(out)))
        # Check vs a reference with matching bf16-operand casting.
        assert float(jnp.max(jnp.abs(out - refbf))) < 1e-2, \
            "mismatch vs bf16-matched reference"
        # Looser check vs the pure-f32 module semantics.
        assert float(jnp.max(jnp.abs(out - ref32))) < 6e-2, \
            "mismatch vs f32 reference"

    print("KERNEL_OK")
</pallas_src>

<mosaic_0001>
module attributes {stable_mosaic.version = 11 : i64} {
  func.func @_qkv_proj_kernel(%arg0: i32, %arg1: i32, %arg2: memref<1x256x128xf32, #tpu.memory_space<vmem>>, %arg3: memref<128x384xbf16, #tpu.memory_space<vmem>>, %arg4: memref<1x384xf32, #tpu.memory_space<vmem>>, %arg5: memref<1x256x128xbf16, #tpu.memory_space<vmem>>, %arg6: memref<1x256x128xbf16, #tpu.memory_space<vmem>>, %arg7: memref<1x256x128xbf16, #tpu.memory_space<vmem>>) attributes {dimension_semantics = [#tpu.dimension_semantics<parallel>, #tpu.dimension_semantics<parallel>], iteration_bounds = array<i64: 2, 1>, scalar_prefetch = 0 : i64, scratch_operands = 0 : i64, tpu.core_type = #tpu.core_type<tc>, window_params = [{transform_indices = @transform_0, window_bounds = array<i64: 1, 256, 128>}, {pipeline_mode = #tpu.pipeline_mode<synchronous>, transform_indices = @transform_1, window_bounds = array<i64: 128, 384>}, {pipeline_mode = #tpu.pipeline_mode<synchronous>, transform_indices = @transform_2, window_bounds = array<i64: 1, 384>}, {transform_indices = @transform_3, window_bounds = array<i64: 1, 256, 128>}, {transform_indices = @transform_4, window_bounds = array<i64: 1, 256, 128>}, {transform_indices = @transform_5, window_bounds = array<i64: 1, 256, 128>}]} {
    %c0 = arith.constant 0 : index
    %c0_0 = arith.constant 0 : index
    %c0_1 = arith.constant 0 : index
    %0 = vector.load %arg2[%c0, %c0_0, %c0_1] : memref<1x256x128xf32, #tpu.memory_space<vmem>>, vector<1x256x128xf32>
    %1 = vector.shape_cast %0 : vector<1x256x128xf32> to vector<256x128xf32>
    %2 = arith.truncf %1 : vector<256x128xf32> to vector<256x128xbf16>
    %c0_2 = arith.constant 0 : index
    %c0_3 = arith.constant 0 : index
    %3 = vector.load %arg3[%c0_2, %c0_3] : memref<128x384xbf16, #tpu.memory_space<vmem>>, vector<128x384xbf16>
    %cst = arith.constant dense<0.000000e+00> : vector<256x384xf32>
    %4 = tpu.matmul %2, %3, %cst {dimension_numbers = #tpu.dot_dimension_numbers<[1], [0], [0], [1], [0, 0, 1, 1], [], []>} : vector<256x128xbf16>, vector<128x384xbf16>, vector<256x384xf32> -> vector<256x384xf32>
    %c0_4 = arith.constant 0 : index
    %c0_5 = arith.constant 0 : index
    %5 = vector.load %arg4[%c0_4, %c0_5] : memref<1x384xf32, #tpu.memory_space<vmem>>, vector<1x384xf32>
    %6 = vector.broadcast %5 : vector<1x384xf32> to vector<256x384xf32>
    %7 = arith.addf %4, %6 : vector<256x384xf32>
    %8 = vector.extract_strided_slice %7 {offsets = [0, 0], sizes = [256, 128], strides = [1, 1]} : vector<256x384xf32> to vector<256x128xf32>
    %cst_6 = arith.constant 0.176776692 : f32
    %9 = vector.broadcast %cst_6 : f32 to vector<256x128xf32>
    %10 = arith.mulf %8, %9 : vector<256x128xf32>
    %11 = arith.truncf %10 : vector<256x128xf32> to vector<256x128xbf16>
    %c0_7 = arith.constant 0 : index
    %c0_8 = arith.constant 0 : index
    %c0_9 = arith.constant 0 : index
    %12 = vector.load %arg5[%c0_7, %c0_8, %c0_9] : memref<1x256x128xbf16, #tpu.memory_space<vmem>>, vector<1x256x128xbf16>
    %13 = vector.shape_cast %12 : vector<1x256x128xbf16> to vector<256x128xbf16>
    %14 = vector.shape_cast %11 : vector<256x128xbf16> to vector<1x256x128xbf16>
    tpu.vector_store %arg5[%c0_7, %c0_8, %c0_9], %14 {strides = array<i32>} : memref<1x256x128xbf16, #tpu.memory_space<vmem>>, vector<1x256x128xbf16>,
    %15 = vector.extract_strided_slice %7 {offsets = [0, 128], sizes = [256, 128], strides = [1, 1]} : vector<256x384xf32> to vector<256x128xf32>
    %16 = arith.truncf %15 : vector<256x128xf32> to vector<256x128xbf16>
    %c0_10 = arith.constant 0 : index
    %c0_11 = arith.constant 0 : index
    %c0_12 = arith.constant 0 : index
    %17 = vector.load %arg6[%c0_10, %c0_11, %c0_12] : memref<1x256x128xbf16, #tpu.memory_space<vmem>>, vector<1x256x128xbf16>
    %18 = vector.shape_cast %17 : vector<1x256x128xbf16> to vector<256x128xbf16>
    %19 = vector.shape_cast %16 : vector<256x128xbf16> to vector<1x256x128xbf16>
    tpu.vector_store %arg6[%c0_10, %c0_11, %c0_12], %19 {strides = array<i32>} : memref<1x256x128xbf16, #tpu.memory_space<vmem>>, vector<1x256x128xbf16>,
    %20 = vector.extract_strided_slice %7 {offsets = [0, 256], sizes = [256, 128], strides = [1, 1]} : vector<256x384xf32> to vector<256x128xf32>
    %21 = arith.truncf %20 : vector<256x128xf32> to vector<256x128xbf16>
    %c0_13 = arith.constant 0 : index
    %c0_14 = arith.constant 0 : index
    %c0_15 = arith.constant 0 : index
    %22 = vector.load %arg7[%c0_13, %c0_14, %c0_15] : memref<1x256x128xbf16, #tpu.memory_space<vmem>>, vector<1x256x128xbf16>
    %23 = vector.shape_cast %22 : vector<1x256x128xbf16> to vector<256x128xbf16>
    %24 = vector.shape_cast %21 : vector<256x128xbf16> to vector<1x256x128xbf16>
    tpu.vector_store %arg7[%c0_13, %c0_14, %c0_15], %24 {strides = array<i32>} : memref<1x256x128xbf16, #tpu.memory_space<vmem>>, vector<1x256x128xbf16>,
    return
  }
  func.func @transform_0(%arg0: i32, %arg1: i32) -> (i32, i32, i32) {
    %c0_i32 = arith.constant 0 : i32
    %c0_i32_0 = arith.constant 0 : i32
    return %arg0, %arg1, %c0_i32 : i32, i32, i32
  }
  func.func @transform_1(%arg0: i32, %arg1: i32) -> (i32, i32) {
    %c0_i32 = arith.constant 0 : i32
    %c0_i32_0 = arith.constant 0 : i32
    %c0_i32_1 = arith.constant 0 : i32
    return %c0_i32, %c0_i32_0 : i32, i32
  }
  func.func @transform_2(%arg0: i32, %arg1: i32) -> (i32, i32) {
    %c0_i32 = arith.constant 0 : i32
    %c0_i32_0 = arith.constant 0 : i32
    %c0_i32_1 = arith.constant 0 : i32
    return %c0_i32, %c0_i32_0 : i32, i32
  }
  func.func @transform_3(%arg0: i32, %arg1: i32) -> (i32, i32, i32) {
    %c0_i32 = arith.constant 0 : i32
    %c0_i32_0 = arith.constant 0 : i32
    return %arg0, %arg1, %c0_i32 : i32, i32, i32
  }
  func.func @transform_4(%arg0: i32, %arg1: i32) -> (i32, i32, i32) {
    %c0_i32 = arith.constant 0 : i32
    %c0_i32_0 = arith.constant 0 : i32
    return %arg0, %arg1, %c0_i32 : i32, i32, i32
  }
  func.func @transform_5(%arg0: i32, %arg1: i32) -> (i32, i32, i32) {
    %c0_i32 = arith.constant 0 : i32
    %c0_i32_0 = arith.constant 0 : i32
    return %arg0, %arg1, %c0_i32 : i32, i32, i32
  }
}

module attributes {stable_mosaic.version = 11 : i64} {
  func.func @_qkv_proj_kernel(%arg0: i32, %arg1: i32, %arg2: memref<1x256x128xf32, #tpu.memory_space<vmem>>, %arg3: memref<128x384xbf16, #tpu.memory_space<vmem>>, %arg4: memref<1x384xf32, #tpu.memory_space<vmem>>, %arg5: memref<1x256x128xbf16, #tpu.memory_space<vmem>>, %arg6: memref<1x256x128xbf16, #tpu.memory_space<vmem>>, %arg7: memref<1x256x128xbf16, #tpu.memory_space<vmem>>) attributes {dimension_semantics = [#tpu.dimension_semantics<parallel>, #tpu.dimension_semantics<parallel>], iteration_bounds = array<i64: 2, 1>, scalar_prefetch = 0 : i64, scratch_operands = 0 : i64, tpu.core_type = #tpu.core_type<tc>, window_params = [{transform_indices = @transform_0, window_bounds = array<i64: 1, 256, 128>}, {pipeline_mode = #tpu.pipeline_mode<synchronous>, transform_indices = @transform_1, window_bounds = array<i64: 128, 384>}, {pipeline_mode = #tpu.pipeline_mode<synchronous>, transform_indices = @transform_2, window_bounds = array<i64: 1, 384>}, {transform_indices = @transform_3, window_bounds = array<i64: 1, 256, 128>}, {transform_indices = @transform_4, window_bounds = array<i64: 1, 256, 128>}, {transform_indices = @transform_5, window_bounds = array<i64: 1, 256, 128>}]} {
    %c0 = arith.constant 0 : index
    %c0_0 = arith.constant 0 : index
    %c0_1 = arith.constant 0 : index
    %0 = vector.load %arg2[%c0, %c0_0, %c0_1] : memref<1x256x128xf32, #tpu.memory_space<vmem>>, vector<1x256x128xf32>
    %1 = vector.shape_cast %0 : vector<1x256x128xf32> to vector<256x128xf32>
    %2 = arith.truncf %1 : vector<256x128xf32> to vector<256x128xbf16>
    %c0_2 = arith.constant 0 : index
    %c0_3 = arith.constant 0 : index
    %3 = vector.load %arg3[%c0_2, %c0_3] : memref<128x384xbf16, #tpu.memory_space<vmem>>, vector<128x384xbf16>
    %cst = arith.constant dense<0.000000e+00> : vector<256x384xf32>
    %4 = tpu.matmul %2, %3, %cst {dimension_numbers = #tpu.dot_dimension_numbers<[1], [0], [0], [1], [0, 0, 1, 1], [], []>} : vector<256x128xbf16>, vector<128x384xbf16>, vector<256x384xf32> -> vector<256x384xf32>
    %c0_4 = arith.constant 0 : index
    %c0_5 = arith.constant 0 : index
    %5 = vector.load %arg4[%c0_4, %c0_5] : memref<1x384xf32, #tpu.memory_space<vmem>>, vector<1x384xf32>
    %6 = vector.broadcast %5 : vector<1x384xf32> to vector<256x384xf32>
    %7 = arith.addf %4, %6 : vector<256x384xf32>
    %8 = vector.extract_strided_slice %7 {offsets = [0, 0], sizes = [256, 128], strides = [1, 1]} : vector<256x384xf32> to vector<256x128xf32>
    %cst_6 = arith.constant 0.176776692 : f32
    %9 = vector.broadcast %cst_6 : f32 to vector<256x128xf32>
    %10 = arith.mulf %8, %9 : vector<256x128xf32>
    %11 = arith.truncf %10 : vector<256x128xf32> to vector<256x128xbf16>
    %c0_7 = arith.constant 0 : index
    %c0_8 = arith.constant 0 : index
    %c0_9 = arith.constant 0 : index
    %12 = vector.load %arg5[%c0_7, %c0_8, %c0_9] : memref<1x256x128xbf16, #tpu.memory_space<vmem>>, vector<1x256x128xbf16>
    %13 = vector.shape_cast %12 : vector<1x256x128xbf16> to vector<256x128xbf16>
    %14 = vector.shape_cast %11 : vector<256x128xbf16> to vector<1x256x128xbf16>
    tpu.vector_store %arg5[%c0_7, %c0_8, %c0_9], %14 {strides = array<i32>} : memref<1x256x128xbf16, #tpu.memory_space<vmem>>, vector<1x256x128xbf16>,
    %15 = vector.extract_strided_slice %7 {offsets = [0, 128], sizes = [256, 128], strides = [1, 1]} : vector<256x384xf32> to vector<256x128xf32>
    %16 = arith.truncf %15 : vector<256x128xf32> to vector<256x128xbf16>
    %c0_10 = arith.constant 0 : index
    %c0_11 = arith.constant 0 : index
    %c0_12 = arith.constant 0 : index
    %17 = vector.load %arg6[%c0_10, %c0_11, %c0_12] : memref<1x256x128xbf16, #tpu.memory_space<vmem>>, vector<1x256x128xbf16>
    %18 = vector.shape_cast %17 : vector<1x256x128xbf16> to vector<256x128xbf16>
    %19 = vector.shape_cast %16 : vector<256x128xbf16> to vector<1x256x128xbf16>
    tpu.vector_store %arg6[%c0_10, %c0_11, %c0_12], %19 {strides = array<i32>} : memref<1x256x128xbf16, #tpu.memory_space<vmem>>, vector<1x256x128xbf16>,
    %20 = vector.extract_strided_slice %7 {offsets = [0, 256], sizes = [256, 128], strides = [1, 1]} : vector<256x384xf32> to vector<256x128xf32>
    %21 = arith.truncf %20 : vector<256x128xf32> to vector<256x128xbf16>
    %c0_13 = arith.constant 0 : index
    %c0_14 = arith.constant 0 : index
    %c0_15 = arith.constant 0 : index
    %22 = vector.load %arg7[%c0_13, %c0_14, %c0_15] : memref<1x256x128xbf16, #tpu.memory_space<vmem>>, vector<1x256x128xbf16>
    %23 = vector.shape_cast %22 : vector<1x256x128xbf16> to vector<256x128xbf16>
    %24 = vector.shape_cast %21 : vector<256x128xbf16> to vector<1x256x128xbf16>
    tpu.vector_store %arg7[%c0_13, %c0_14, %c0_15], %24 {strides = array<i32>} : memref<1x256x128xbf16, #tpu.memory_space<vmem>>, vector<1x256x128xbf16>,
    return
  }
  func.func @transform_0(%arg0: i32, %arg1: i32) -> (i32, i32, i32) {
    %c0_i32 = arith.constant 0 : i32
    %c0_i32_0 = arith.constant 0 : i32
    return %arg0, %arg1, %c0_i32 : i32, i32, i32
  }
  func.func @transform_1(%arg0: i32, %arg1: i32) -> (i32, i32) {
    %c0_i32 = arith.constant 0 : i32
    %c0_i32_0 = arith.constant 0 : i32
    %c0_i32_1 = arith.constant 0 : i32
    return %c0_i32, %c0_i32_0 : i32, i32
  }
  func.func @transform_2(%arg0: i32, %arg1: i32) -> (i32, i32) {
    %c0_i32 = arith.constant 0 : i32
    %c0_i32_0 = arith.constant 0 : i32
    %c0_i32_1 = arith.constant 0 : i32
    return %c0_i32, %c0_i32_0 : i32, i32
  }
  func.func @transform_3(%arg0: i32, %arg1: i32) -> (i32, i32, i32) {
    %c0_i32 = arith.constant 0 : i32
    %c0_i32_0 = arith.constant 0 : i32
    return %arg0, %arg1, %c0_i32 : i32, i32, i32
  }
  func.func @transform_4(%arg0: i32, %arg1: i32) -> (i32, i32, i32) {
    %c0_i32 = arith.constant 0 : i32
    %c0_i32_0 = arith.constant 0 : i32
    return %arg0, %arg1, %c0_i32 : i32, i32, i32
  }
  func.func @transform_5(%arg0: i32, %arg1: i32) -> (i32, i32, i32) {
    %c0_i32 = arith.constant 0 : i32
    %c0_i32_0 = arith.constant 0 : i32
    return %arg0, %arg1, %c0_i32 : i32, i32, i32
  }
}

</mosaic_0001>

<llo_original>
// kernel: tpu_custom_call.1
$region0: #{tpu_custom_call.1}
  #allocation0 [shape = 'u32[]', space=smem, size = 0x4, offset = 0x4, fixed_abs, tag = 'smem constant byte address 0x4 - core index']
  #allocation1 [shape = 'u32[144,128]{1,0:T(1,128)}', space=vmem, size = 0x12000, scoped, tag = 'internal scratch']
  %s0 = inlined_call_operand.hbm [shape: f32[2,256,128], index: 0, kind: input, shape index: {}]
  %s1 = inlined_call_operand.hbm [shape: bf16[128,384], index: 1, kind: input, shape index: {}]
  %s2 = inlined_call_operand.vmem [shape: f32[1,384], index: 2, kind: input, shape index: {}]
  %s3 = inlined_call_operand.hbm [shape: bf16[2,256,128], index: 3, kind: output, shape index: {0}]
  %s4 = inlined_call_operand.hbm [shape: bf16[2,256,128], index: 4, kind: output, shape index: {1}]
  %s5 = inlined_call_operand.hbm [shape: bf16[2,256,128], index: 5, kind: output, shape index: {2}]
  %6 = xla_tuple %s3, %s4, %s5
  %s7 = sld [smem:[#allocation0]]
  $region69: #{tpu_custom_call.1} parent=0
    _
  %s9 = ssub.s32 1, %s7
  %s10 = scalar_select 0, %s9, %s7
  $region1: #{tpu_custom_call.1} parent=0
    #allocation2 [shape = 'u8[262144]{0}', space=vmem, size = 0x40000, scoped, tag = 'input window, operand 0']
    #allocation3 [shape = 's32[2]{0}', space=sflag, size = 0x8, scoped, tag = 'scoped memory for tpu_custom_call.1']
    #allocation4 [shape = 's32[2]{0}', space=sflag, size = 0x8, scoped, tag = 'scoped memory for tpu_custom_call.1']
    #allocation5 [shape = 'u8[98304]{0}', space=vmem, size = 0x18000, scoped, tag = 'input window, operand 1, single buffered']
    #allocation6 [shape = 's32[1]{0}', space=sflag, size = 0x4, scoped, tag = 'scoped memory for tpu_custom_call.1']
    #allocation7 [shape = 'u8[131072]{0}', space=vmem, size = 0x20000, scoped, tag = 'output window, operand 0']
    #allocation8 [shape = 'u8[131072]{0}', space=vmem, size = 0x20000, scoped, tag = 'output window, operand 1']
    #allocation9 [shape = 's32[2]{0}', space=sflag, size = 0x8, scoped, tag = 'scoped memory for tpu_custom_call.1']
    #allocation10 [shape = 'u8[131072]{0}', space=vmem, size = 0x20000, scoped, tag = 'output window, operand 2']
    %11 = vsyncpa [#allocation3], 0
    %s12 = scalar_lea.sflag [#allocation3], 1
    %13 = vsyncpa %s12, 0
    %14 = vsyncpa [#allocation6], 0
    %15 = vsyncpa [#allocation4], 0
    %s16 = scalar_lea.sflag [#allocation4], 1
    %17 = vsyncpa %s16, 0
    %18 = vsyncpa [#allocation9], 0
    %s19 = scalar_lea.sflag [#allocation9], 1
    %20 = vsyncpa %s19, 0
    loop: start=0, step=1, limit=4
    $region2: #{tpu_custom_call.1} parent=1 // loop_pre_header
      _
    $region3: #{tpu_custom_call.1} parent=1 // loop_header
      %s22 = sphi 0, %s26
      %p23 = scmp.ge.s32.totalorder %s22, 4
      %s29 = sphi 0, %s41
      %s30 = sphi 0, %s37
      %s31 = sphi 0, %s29
      %s32 = sphi 0, %s30
      %s33 = sphi 0, %s31
      %s34 = sphi 0, %s32
      %s46 = sphi 0, %s48
      %s49 = sphi 0, %s46
      %s50 = sphi 0, %s49
      %s66 = sphi 0, %s50
      %s70 = sphi 0, %s70
      %s72 = sphi 0, %s70
      %s73 = sphi 0, %s72
      %s87 = sphi 0, %s73
      %s91 = sphi 0, %s91
      %s93 = sphi 0, %s91
      %s94 = sphi 0, %s93
      %s108 = sphi 0, %s94
      %s116 = sphi 0, %s118
      %s119 = sphi 0, %s116
      %s120 = sphi 0, %s119
      %s136 = sphi 0, %s120
      %s144 = sphi 0, %s146
      %s147 = sphi 0, %s144
      %s148 = sphi 0, %s147
      %s164 = sphi 0, %s148
      %s172 = sphi 0, %s174
      %s175 = sphi 0, %s172
      %s176 = sphi 0, %s175
      %s192 = sphi 0, %s176
    $region4: #{tpu_custom_call.1} parent=1 // loop_header_branch
      %25 = sbr.rel (%p23) target = $region8
    $region5: #{tpu_custom_call.1} parent=1 // loop_body
      %s27 = ssub.s32 %s22, 1
      %s28 = ssub.s32 %s22, 2
      %s35 = sadd.s32 1, %s30
      %p36 = scmp.ge.s32.totalorder %s35, 1
      %s37 = scalar_select %p36, 0, %s35
      %s38 = sadd.s32 1, %s29
      %s39 = scalar_select %p36, %s38, %s29
      %p40 = scmp.ge.s32.totalorder %s39, 2
      %s41 = scalar_select %p40, 0, %s39
      %s42 = ssub.s32 %s29, %s41
      %s43 = ssub.s32 %s30, %s37
      %s44 = sor.u32 %s42, %s43
      %p45 = scmp.eq.s32.totalorder %s44, 0
      %s47 = sadd.s32 %s46, 1
      %s48 = scalar_select %p45, %s46, %s47
      %p51 = pneg %p45
      %p52 = scmp.eq.s32.totalorder %s22, 1
      %p53 = por %p51, %p52
      %p54 = scmp.ne.s32.totalorder %s46, %s49
      %p55 = scmp.eq.s32.totalorder %s22, 0
      %p56 = por %p54, %p55
      %p57 = scmp.ne.s32.totalorder %s46, %s49
      %p58 = scmp.eq.s32.totalorder %s27, 1
      %p59 = por %p57, %p58
      %p60 = scmp.ne.s32.totalorder %s49, %s50
      %p61 = scmp.eq.s32.totalorder %s27, 0
      %p62 = por %p60, %p61
      %p63 = scmp.ne.s32.totalorder %s49, %s50
      %p64 = scmp.eq.s32.totalorder %s28, 1
      %p65 = por %p63, %p64
      %p67 = scmp.ne.s32.totalorder %s50, %s66
      %p68 = scmp.eq.s32.totalorder %s28, 0
      %p69 = por %p67, %p68
      %s71 = sadd.s32 %s70, 1
      %p74 = scmp.eq.s32.totalorder %s22, 1
      %p75 = scmp.ne.s32.totalorder %s70, %s72
      %p76 = scmp.eq.s32.totalorder %s22, 0
      %p77 = por %p75, %p76
      %p78 = scmp.ne.s32.totalorder %s70, %s72
      %p79 = scmp.eq.s32.totalorder %s27, 1
      %p80 = por %p78, %p79
      %p81 = scmp.ne.s32.totalorder %s72, %s73
      %p82 = scmp.eq.s32.totalorder %s27, 0
      %p83 = por %p81, %p82
      %p84 = scmp.ne.s32.totalorder %s72, %s73
      %p85 = scmp.eq.s32.totalorder %s28, 1
      %p86 = por %p84, %p85
      %p88 = scmp.ne.s32.totalorder %s73, %s87
      %p89 = scmp.eq.s32.totalorder %s28, 0
      %p90 = por %p88, %p89
      %s92 = sadd.s32 %s91, 1
      %p95 = scmp.eq.s32.totalorder %s22, 1
      %p96 = scmp.ne.s32.totalorder %s91, %s93
      %p97 = scmp.eq.s32.totalorder %s22, 0
      %p98 = por %p96, %p97
      %p99 = scmp.ne.s32.totalorder %s91, %s93
      %p100 = scmp.eq.s32.totalorder %s27, 1
      %p101 = por %p99, %p100
      %p102 = scmp.ne.s32.totalorder %s93, %s94
      %p103 = scmp.eq.s32.totalorder %s27, 0
      %p104 = por %p102, %p103
      %p105 = scmp.ne.s32.totalorder %s93, %s94
      %p106 = scmp.eq.s32.totalorder %s28, 1
      %p107 = por %p105, %p106
      %p109 = scmp.ne.s32.totalorder %s94, %s108
      %p110 = scmp.eq.s32.totalorder %s28, 0
      %p111 = por %p109, %p110
      %s112 = ssub.s32 %s29, %s41
      %s113 = ssub.s32 %s30, %s37
      %s114 = sor.u32 %s112, %s113
      %p115 = scmp.eq.s32.totalorder %s114, 0
      %s117 = sadd.s32 %s116, 1
      %s118 = scalar_select %p115, %s116, %s117
      %p121 = pneg %p115
      %p122 = scmp.eq.s32.totalorder %s22, 1
      %p123 = por %p121, %p122
      %p124 = scmp.ne.s32.totalorder %s116, %s119
      %p125 = scmp.eq.s32.totalorder %s22, 0
      %p126 = por %p124, %p125
      %p127 = scmp.ne.s32.totalorder %s116, %s119
      %p128 = scmp.eq.s32.totalorder %s27, 1
      %p129 = por %p127, %p128
      %p130 = scmp.ne.s32.totalorder %s119, %s120
      %p131 = scmp.eq.s32.totalorder %s27, 0
      %p132 = por %p130, %p131
      %p133 = scmp.ne.s32.totalorder %s119, %s120
      %p134 = scmp.eq.s32.totalorder %s28, 1
      %p135 = por %p133, %p134
      %p137 = scmp.ne.s32.totalorder %s120, %s136
      %p138 = scmp.eq.s32.totalorder %s28, 0
      %p139 = por %p137, %p138
      %s140 = ssub.s32 %s29, %s41
      %s141 = ssub.s32 %s30, %s37
      %s142 = sor.u32 %s140, %s141
      %p143 = scmp.eq.s32.totalorder %s142, 0
      %s145 = sadd.s32 %s144, 1
      %s146 = scalar_select %p143, %s144, %s145
      %p149 = pneg %p143
      %p150 = scmp.eq.s32.totalorder %s22, 1
      %p151 = por %p149, %p150
      %p152 = scmp.ne.s32.totalorder %s144, %s147
      %p153 = scmp.eq.s32.totalorder %s22, 0
      %p154 = por %p152, %p153
      %p155 = scmp.ne.s32.totalorder %s144, %s147
      %p156 = scmp.eq.s32.totalorder %s27, 1
      %p157 = por %p155, %p156
      %p158 = scmp.ne.s32.totalorder %s147, %s148
      %p159 = scmp.eq.s32.totalorder %s27, 0
      %p160 = por %p158, %p159
      %p161 = scmp.ne.s32.totalorder %s147, %s148
      %p162 = scmp.eq.s32.totalorder %s28, 1
      %p163 = por %p161, %p162
      %p165 = scmp.ne.s32.totalorder %s148, %s164
      %p166 = scmp.eq.s32.totalorder %s28, 0
      %p167 = por %p165, %p166
      %s168 = ssub.s32 %s29, %s41
      %s169 = ssub.s32 %s30, %s37
      %s170 = sor.u32 %s168, %s169
      %p171 = scmp.eq.s32.totalorder %s170, 0
      %s173 = sadd.s32 %s172, 1
      %s174 = scalar_select %p171, %s172, %s173
      %p177 = pneg %p171
      %p178 = scmp.eq.s32.totalorder %s22, 1
      %p179 = por %p177, %p178
      %p180 = scmp.ne.s32.totalorder %s172, %s175
      %p181 = scmp.eq.s32.totalorder %s22, 0
      %p182 = por %p180, %p181
      %p183 = scmp.ne.s32.totalorder %s172, %s175
      %p184 = scmp.eq.s32.totalorder %s27, 1
      %p185 = por %p183, %p184
      %p186 = scmp.ne.s32.totalorder %s175, %s176
      %p187 = scmp.eq.s32.totalorder %s27, 0
      %p188 = por %p186, %p187
      %p189 = scmp.ne.s32.totalorder %s175, %s176
      %p190 = scmp.eq.s32.totalorder %s28, 1
      %p191 = por %p189, %p190
      %p193 = scmp.ne.s32.totalorder %s176, %s192
      %p194 = scmp.eq.s32.totalorder %s28, 0
      %p195 = por %p193, %p194
      %p196 = scmp.le.s32.totalorder 1, %s22
      %p197 = scmp.lt.s32.totalorder %s22, 3
      %p198 = pnand %p196, %p197
      %p199 = pneg %p198
      // Predicated region
      $region9: #{tpu_custom_call.1} parent=5 // pred_check
        _
      $region10: #{tpu_custom_call.1} parent=5 // pred_check_branch
        %201 = sbr.rel (%p198) target = $region12
      $region11: #{tpu_custom_call.1} parent=5 // pred_region
        %s202 = ssub.s32 %s22, 1
        // Predicated region
        $region13: #{tpu_custom_call.1} parent=11 // pred_check
          %p203 = pneg %p83
        $region14: #{tpu_custom_call.1} parent=11 // pred_check_branch
          %205 = sbr.rel (%p203) target = $region16
        $region15: #{tpu_custom_call.1} parent=11 // pred_region
          %s207 = ssub.s32 3072, 3072
          %208 = vsyncadd [#allocation6], %s207
          %s209 = sshll.u32 [#allocation5], 4
          %s210 = int_to_ptr.vmem [resolvable:$true] %s209
          %215 = dma.hbm_to_vmem [thread:$0]  %s1, 3072, %s210, [#allocation6], 192, 192, 12
        $region16: #{tpu_custom_call.1} parent=11 // pred_fallthru
          _
        // Predicated region
        $region17: #{tpu_custom_call.1} parent=11 // pred_check
          %p216 = pneg %p104
        $region18: #{tpu_custom_call.1} parent=11 // pred_check_branch
          %218 = sbr.rel (%p216) target = $region20
        $region19: #{tpu_custom_call.1} parent=11 // pred_region
          _
        $region20: #{tpu_custom_call.1} parent=11 // pred_fallthru
          _
      $region12: #{tpu_custom_call.1} parent=5 // pred_fallthru
        _
      %p219 = scmp.lt.s32.totalorder %s22, 2
      // Predicated region
      $region21: #{tpu_custom_call.1} parent=5 // pred_check
        %p220 = pneg %p219
      $region22: #{tpu_custom_call.1} parent=5 // pred_check_branch
        %222 = sbr.rel (%p220) target = $region24
      $region23: #{tpu_custom_call.1} parent=5 // pred_region
        // Predicated region
        $region25: #{tpu_custom_call.1} parent=23 // pred_check
          %p223 = pneg %p56
        $region26: #{tpu_custom_call.1} parent=23 // pred_check_branch
          %225 = sbr.rel (%p223) target = $region28
        $region27: #{tpu_custom_call.1} parent=23 // pred_region
          %s226 = sand.u32 %s46, 1
          %s227 = scalar_lea.sflag [#allocation3], %s226
          %s228 = sand.u32 %s46, 1
          %s229 = smul.addr %s228, 256
          %s230 = scalar_lea.vmem [#allocation2], %s229
          %s231 = smul.u32 32, %s30
          %s233 = ssub.s32 4096, 4096
          %234 = vsyncadd %s227, %s233
          %s235 = smul.addr %s29, 32
          %s236 = sadd.s32 %s231, %s235
          %s237 = smul.addr %s236, 128
          %s238 = scalar_lea.hbm %s0, %s237
          %s239 = sshll.u32 %s230, 4
          %s240 = int_to_ptr.vmem [resolvable:$true] %s239
          %245 = dma.hbm_to_vmem [thread:$0]  %s238, 4096, %s240, %s227, 128, 128, 8
        $region28: #{tpu_custom_call.1} parent=23 // pred_fallthru
          _
      $region24: #{tpu_custom_call.1} parent=5 // pred_fallthru
        _
      %p246 = scmp.le.s32.totalorder 1, %s22
      %p247 = scmp.lt.s32.totalorder %s22, 3
      %p248 = pnand %p246, %p247
      %p249 = pneg %p248
      // Predicated region
      $region29: #{tpu_custom_call.1} parent=5 // pred_check
        _
      $region30: #{tpu_custom_call.1} parent=5 // pred_check_branch
        %251 = sbr.rel (%p248) target = $region32
      $region31: #{tpu_custom_call.1} parent=5 // pred_region
        %s252 = ssub.s32 %s22, 1
        %s253 = sand.u32 %s49, 1
        %s254 = scalar_lea.sflag [#allocation3], %s253
        %s255 = sand.u32 %s49, 1
        %s256 = smul.addr %s255, 256
        %s257 = scalar_lea.vmem [#allocation2], %s256
        // Predicated region
        $region33: #{tpu_custom_call.1} parent=31 // pred_check
          %p258 = pneg %p62
        $region34: #{tpu_custom_call.1} parent=31 // pred_check_branch
          %260 = sbr.rel (%p258) target = $region36
        $region35: #{tpu_custom_call.1} parent=31 // pred_region
          %261 = dma.done %s254, 4096
        $region36: #{tpu_custom_call.1} parent=31 // pred_fallthru
          _
        // Predicated region
        $region37: #{tpu_custom_call.1} parent=31 // pred_check
          %p262 = pneg %p83
        $region38: #{tpu_custom_call.1} parent=31 // pred_check_branch
          %264 = sbr.rel (%p262) target = $region40
        $region39: #{tpu_custom_call.1} parent=31 // pred_region
          %265 = dma.done [#allocation6], 3072
        $region40: #{tpu_custom_call.1} parent=31 // pred_fallthru
          _
        %s266 = sand.u32 %s49, 1
        %s267 = scalar_lea.sflag [#allocation3], %s266
        %s268 = sand.u32 %s49, 1
        %s269 = smul.addr %s268, 256
        %s270 = scalar_lea.vmem [#allocation2], %s269
        %p271 = pneg %p62
        %p272 = pneg %p59
        %p273 = pneg %p83
        %p274 = pneg %p80
        %p275 = pneg %p104
        %p276 = pneg %p101
        %p277 = pneg %p132
        %p278 = pneg %p129
        %s279 = sand.u32 %s119, 1
        %s280 = scalar_lea.sflag [#allocation4], %s279
        %s281 = sand.u32 %s119, 1
        %s282 = smul.addr %s281, 128
        %s283 = scalar_lea.vmem [#allocation7], %s282
        %p284 = pneg %p160
        %p285 = pneg %p157
        %s286 = sand.u32 %s27, 1
        %s287 = scalar_lea.sflag [#allocation9], %s286
        %s288 = sand.u32 %s147, 1
        %s289 = smul.addr %s288, 128
        %s290 = scalar_lea.vmem [#allocation8], %s289
        %p291 = pneg %p188
        %p292 = pneg %p185
        %s293 = sand.u32 %s27, 1
        %s294 = scalar_lea.sflag [#allocation9], %s293
        %s295 = sand.u32 %s175, 1
        %s296 = smul.addr %s295, 128
        %s297 = scalar_lea.vmem [#allocation10], %s296
        %s298 = smul.u32 32, %s32
        %s299 = smul.u32 32, %s32
        %s300 = smul.u32 32, %s32
        %s301 = smul.u32 32, %s32
        %v303 = vld [vmem:[%s257] sm:$0xff]
        %v304 = vld [vmem:[%s257 + $0x8] sm:$0xff]
        %v305 = vld [vmem:[%s257 + $0x10] sm:$0xff]
        %v306 = vld [vmem:[%s257 + $0x18] sm:$0xff]
        %v307 = vld [vmem:[%s257 + $0x20] sm:$0xff]
        %v308 = vld [vmem:[%s257 + $0x28] sm:$0xff]
        %v309 = vld [vmem:[%s257 + $0x30] sm:$0xff]
        %v310 = vld [vmem:[%s257 + $0x38] sm:$0xff]
        %v311 = vld [vmem:[%s257 + $0x40] sm:$0xff]
        %v312 = vld [vmem:[%s257 + $0x48] sm:$0xff]
        %v313 = vld [vmem:[%s257 + $0x50] sm:$0xff]
        %v314 = vld [vmem:[%s257 + $0x58] sm:$0xff]
        %v315 = vld [vmem:[%s257 + $0x60] sm:$0xff]
        %v316 = vld [vmem:[%s257 + $0x68] sm:$0xff]
        %v317 = vld [vmem:[%s257 + $0x70] sm:$0xff]
        %v318 = vld [vmem:[%s257 + $0x78] sm:$0xff]
        %v319 = vld [vmem:[%s257 + $0x80] sm:$0xff]
        %v320 = vld [vmem:[%s257 + $0x88] sm:$0xff]
        %v321 = vld [vmem:[%s257 + $0x90] sm:$0xff]
        %v322 = vld [vmem:[%s257 + $0x98] sm:$0xff]
        %v323 = vld [vmem:[%s257 + $0xa0] sm:$0xff]
        %v324 = vld [vmem:[%s257 + $0xa8] sm:$0xff]
        %v325 = vld [vmem:[%s257 + $0xb0] sm:$0xff]
        %v326 = vld [vmem:[%s257 + $0xb8] sm:$0xff]
        %v327 = vld [vmem:[%s257 + $0xc0] sm:$0xff]
        %v328 = vld [vmem:[%s257 + $0xc8] sm:$0xff]
        %v329 = vld [vmem:[%s257 + $0xd0] sm:$0xff]
        %v330 = vld [vmem:[%s257 + $0xd8] sm:$0xff]
        %v331 = vld [vmem:[%s257 + $0xe0] sm:$0xff]
        %v332 = vld [vmem:[%s257 + $0xe8] sm:$0xff]
        %v333 = vld [vmem:[%s257 + $0xf0] sm:$0xff]
        %v334 = vld [vmem:[%s257 + $0xf8] sm:$0xff]
        %v335 = vpack.c.bf16 %v304, %v303
        %v336 = vpack.c.bf16 %v306, %v305
        %v337 = vpack.c.bf16 %v308, %v307
        %v338 = vpack.c.bf16 %v310, %v309
        %v339 = vpack.c.bf16 %v312, %v311
        %v340 = vpack.c.bf16 %v314, %v313
        %v341 = vpack.c.bf16 %v316, %v315
        %v342 = vpack.c.bf16 %v318, %v317
        %v343 = vpack.c.bf16 %v320, %v319
        %v344 = vpack.c.bf16 %v322, %v321
        %v345 = vpack.c.bf16 %v324, %v323
        %v346 = vpack.c.bf16 %v326, %v325
        %v347 = vpack.c.bf16 %v328, %v327
        %v348 = vpack.c.bf16 %v330, %v329
        %v349 = vpack.c.bf16 %v332, %v331
        %v350 = vpack.c.bf16 %v334, %v333
        %v351 = vld [vmem:[#allocation5] sm:$0xff]
        %v352 = vld [vmem:[#allocation5 + $0x8] sm:$0xf]
        %v353 = vld [vmem:[#allocation5 + $0xc] sm:$0xff]
        %v354 = vld [vmem:[#allocation5 + $0x14] sm:$0xf]
        %v355 = vld [vmem:[#allocation5 + $0x18] sm:$0xff]
        %v356 = vld [vmem:[#allocation5 + $0x20] sm:$0xf]
        %v357 = vld [vmem:[#allocation5 + $0x24] sm:$0xff]
        %v358 = vld [vmem:[#allocation5 + $0x2c] sm:$0xf]
        %v359 = vld [vmem:[#allocation5 + $0x30] sm:$0xff]
        %v360 = vld [vmem:[#allocation5 + $0x38] sm:$0xf]
        %v361 = vld [vmem:[#allocation5 + $0x3c] sm:$0xff]
        %v362 = vld [vmem:[#allocation5 + $0x44] sm:$0xf]
        %v363 = vld [vmem:[#allocation5 + $0x48] sm:$0xff]
        %v364 = vld [vmem:[#allocation5 + $0x50] sm:$0xf]
        %v365 = vld [vmem:[#allocation5 + $0x54] sm:$0xff]
        %v366 = vld [vmem:[#allocation5 + $0x5c] sm:$0xf]
        %v367 = vld [vmem:[#allocation5 + $0x60] sm:$0xff]
        %v368 = vld [vmem:[#allocation5 + $0x68] sm:$0xf]
        %v369 = vld [vmem:[#allocation5 + $0x6c] sm:$0xff]
        %v370 = vld [vmem:[#allocation5 + $0x74] sm:$0xf]
        %v371 = vld [vmem:[#allocation5 + $0x78] sm:$0xff]
        %v372 = vld [vmem:[#allocation5 + $0x80] sm:$0xf]
        %v373 = vld [vmem:[#allocation5 + $0x84] sm:$0xff]
        %v374 = vld [vmem:[#allocation5 + $0x8c] sm:$0xf]
        %v375 = vld [vmem:[#allocation5 + $0x90] sm:$0xff]
        %v376 = vld [vmem:[#allocation5 + $0x98] sm:$0xf]
        %v377 = vld [vmem:[#allocation5 + $0x9c] sm:$0xff]
        %v378 = vld [vmem:[#allocation5 + $0xa4] sm:$0xf]
        %v379 = vld [vmem:[#allocation5 + $0xa8] sm:$0xff]
        %v380 = vld [vmem:[#allocation5 + $0xb0] sm:$0xf]
        %v381 = vld [vmem:[#allocation5 + $0xb4] sm:$0xff]
        %v382 = vld [vmem:[#allocation5 + $0xbc] sm:$0xf]
        %v383 = vld [vmem:[%s2] sm:$0x7]
        %v385 = vlaneseq
        %v386 = vshrl.u32 %v385, 7
        %v387 = vsub.s32 0, %v386
        %v388 = vrot.slane %v383, %v387
        %v389 = vlaneseq
        %v390 = vshrl.u32 %v389, 7
        %v391 = vsub.s32 1, %v390
        %v392 = vrot.slane %v383, %v391
        %v393 = vlaneseq
        %v394 = vshrl.u32 %v393, 7
        %v395 = vsub.s32 2, %v394
        %v396 = vrot.slane %v383, %v395
        %v432 = vunpack.c.l.b16 %v351
        %v433 = vunpack.c.h.b16 %v351
        %v434 = vunpack.c.l.b16 %v352
        %v435 = vunpack.c.l.b16 %v353
        %v436 = vunpack.c.h.b16 %v353
        %v437 = vunpack.c.l.b16 %v354
        %v438 = vunpack.c.l.b16 %v355
        %v439 = vunpack.c.h.b16 %v355
        %v440 = vunpack.c.l.b16 %v356
        %v441 = vunpack.c.l.b16 %v357
        %v442 = vunpack.c.h.b16 %v357
        %v443 = vunpack.c.l.b16 %v358
        %v444 = vunpack.c.l.b16 %v359
        %v445 = vunpack.c.h.b16 %v359
        %v446 = vunpack.c.l.b16 %v360
        %v447 = vunpack.c.l.b16 %v361
        %v448 = vunpack.c.h.b16 %v361
        %v449 = vunpack.c.l.b16 %v362
        %v450 = vunpack.c.l.b16 %v363
        %v451 = vunpack.c.h.b16 %v363
        %v452 = vunpack.c.l.b16 %v364
        %v453 = vunpack.c.l.b16 %v365
        %v454 = vunpack.c.h.b16 %v365
        %v455 = vunpack.c.l.b16 %v366
        %v456 = vunpack.c.l.b16 %v367
        %v457 = vunpack.c.h.b16 %v367
        %v458 = vunpack.c.l.b16 %v368
        %v459 = vunpack.c.l.b16 %v369
        %v460 = vunpack.c.h.b16 %v369
        %v461 = vunpack.c.l.b16 %v370
        %v462 = vunpack.c.l.b16 %v371
        %v463 = vunpack.c.h.b16 %v371
        %v464 = vunpack.c.l.b16 %v372
        %v465 = vunpack.c.l.b16 %v373
        %v466 = vunpack.c.h.b16 %v373
        %v467 = vunpack.c.l.b16 %v374
        %v468 = vunpack.c.l.b16 %v375
        %v469 = vunpack.c.h.b16 %v375
        %v470 = vunpack.c.l.b16 %v376
        %v471 = vunpack.c.l.b16 %v377
        %v472 = vunpack.c.h.b16 %v377
        %v473 = vunpack.c.l.b16 %v378
        %v474 = vunpack.c.l.b16 %v379
        %v475 = vunpack.c.h.b16 %v379
        %v476 = vunpack.c.l.b16 %v380
        %v477 = vunpack.c.l.b16 %v381
        %v478 = vunpack.c.h.b16 %v381
        %v479 = vunpack.c.l.b16 %v382
        %v480 = vpack.c.b16 %v435, %v432
        %v481 = vpack.c.b16 %v436, %v433
        %v482 = vpack.c.b16 %v437, %v434
        %v483 = vpack.c.b16 %v441, %v438
        %v484 = vpack.c.b16 %v442, %v439
        %v485 = vpack.c.b16 %v443, %v440
        %v486 = vpack.c.b16 %v447, %v444
        %v487 = vpack.c.b16 %v448, %v445
        %v488 = vpack.c.b16 %v449, %v446
        %v489 = vpack.c.b16 %v453, %v450
        %v490 = vpack.c.b16 %v454, %v451
        %v491 = vpack.c.b16 %v455, %v452
        %v492 = vpack.c.b16 %v459, %v456
        %v493 = vpack.c.b16 %v460, %v457
        %v494 = vpack.c.b16 %v461, %v458
        %v495 = vpack.c.b16 %v465, %v462
        %v496 = vpack.c.b16 %v466, %v463
        %v497 = vpack.c.b16 %v467, %v464
        %v498 = vpack.c.b16 %v471, %v468
        %v499 = vpack.c.b16 %v472, %v469
        %v500 = vpack.c.b16 %v473, %v470
        %v501 = vpack.c.b16 %v477, %v474
        %v502 = vpack.c.b16 %v478, %v475
        %v503 = vpack.c.b16 %v479, %v476
        %528 = vmatprep.subr.bf16.mxu0 %v481
        %529 = vmatpush1.bf16.msra.mxu0 %v480
        %530 = vmatprep.subr.bf16.mxu0 %v484
        %531 = vmatpush1.bf16.msra.mxu0 %v483
        %532 = vmatprep.subr.bf16.mxu0 %v487
        %533 = vmatpush1.bf16.msra.mxu0 %v486
        %534 = vmatprep.subr.bf16.mxu0 %v490
        %535 = vmatpush1.bf16.msra.mxu0 %v489
        %536 = vmatprep.subr.bf16.mxu0 %v493
        %537 = vmatpush1.bf16.msra.mxu0 %v492
        %538 = vmatprep.subr.bf16.mxu0 %v496
        %539 = vmatpush1.bf16.msra.mxu0 %v495
        %540 = vmatprep.subr.bf16.mxu0 %v499
        %541 = vmatpush1.bf16.msra.mxu0 %v498
        %542 = vmatprep.subr.bf16.mxu0 %v502
        %543 = vmatpush1.bf16.msra.mxu0 %v501
        %544 = vmatprep.subr.bf16.mxu0 0
        %545 = vmatpush1.bf16.msra.mxu0 0
        %546 = vmatprep.subr.bf16.mxu0 0
        %547 = vmatpush1.bf16.msra.mxu0 0
        %548 = vmatprep.subr.bf16.mxu0 0
        %549 = vmatpush1.bf16.msra.mxu0 0
        %550 = vmatprep.subr.bf16.mxu0 0
        %551 = vmatpush1.bf16.msra.mxu0 0
        %552 = vmatprep.subr.bf16.mxu0 0
        %553 = vmatpush1.bf16.msra.mxu0 0
        %554 = vmatprep.subr.bf16.mxu0 0
        %555 = vmatpush1.bf16.msra.mxu0 0
        %556 = vmatprep.subr.bf16.mxu0 0
        %557 = vmatpush1.bf16.msra.mxu0 0
        %558 = vmatprep.subr.bf16.mxu0 0
        %559 = vmatpush1.bf16.msra.mxu0 0
        %560 = vmatprep.mubr.bf16.mxu0 0
        %561 = vmatmul.mubr.bf16.gmra.mrb[0].mxu0 %v335
        %v562 = vpop.f32.mrb[0].mxu0
        %v563 = vadd.f32 %v388, %v562
        %v564 = vpop.f32.mrb[0].mxu0
        %v565 = vadd.f32 %v392, %v564
        %v566 = vpop.f32.mrb[0].mxu0
        %v567 = vadd.f32 %v388, %v566
        %v568 = vpop.f32.mrb[0].mxu0
        %v569 = vadd.f32 %v392, %v568
        %570 = vmatprep.mubr.bf16.mxu0 0
        %571 = vmatmul.mubr.bf16.gmra.mrb[0].mxu0 %v336
        %v572 = vpop.f32.mrb[0].mxu0
        %v573 = vadd.f32 %v388, %v572
        %v574 = vpop.f32.mrb[0].mxu0
        %v575 = vadd.f32 %v392, %v574
        %v576 = vpop.f32.mrb[0].mxu0
        %v577 = vadd.f32 %v388, %v576
        %v578 = vpop.f32.mrb[0].mxu0
        %v579 = vadd.f32 %v392, %v578
        %580 = vmatprep.mubr.bf16.mxu0 0
        %581 = vmatmul.mubr.bf16.gmra.mrb[0].mxu0 %v337
        %v582 = vpop.f32.mrb[0].mxu0
        %v583 = vadd.f32 %v388, %v582
        %v584 = vpop.f32.mrb[0].mxu0
        %v585 = vadd.f32 %v392, %v584
        %v586 = vpop.f32.mrb[0].mxu0
        %v587 = vadd.f32 %v388, %v586
        %v588 = vpop.f32.mrb[0].mxu0
        %v589 = vadd.f32 %v392, %v588
        %590 = vmatprep.mubr.bf16.mxu0 0
        %591 = vmatmul.mubr.bf16.gmra.mrb[0].mxu0 %v338
        %v592 = vpop.f32.mrb[0].mxu0
        %v593 = vadd.f32 %v388, %v592
        %v594 = vpop.f32.mrb[0].mxu0
        %v595 = vadd.f32 %v392, %v594
        %v596 = vpop.f32.mrb[0].mxu0
        %v597 = vadd.f32 %v388, %v596
        %v598 = vpop.f32.mrb[0].mxu0
        %v599 = vadd.f32 %v392, %v598
        %600 = vmatprep.mubr.bf16.mxu0 0
        %601 = vmatmul.mubr.bf16.gmra.mrb[0].mxu0 %v339
        %v602 = vpop.f32.mrb[0].mxu0
        %v603 = vadd.f32 %v388, %v602
        %v604 = vpop.f32.mrb[0].mxu0
        %v605 = vadd.f32 %v392, %v604
        %v606 = vpop.f32.mrb[0].mxu0
        %v607 = vadd.f32 %v388, %v606
        %v608 = vpop.f32.mrb[0].mxu0
        %v609 = vadd.f32 %v392, %v608
        %610 = vmatprep.mubr.bf16.mxu0 0
        %611 = vmatmul.mubr.bf16.gmra.mrb[0].mxu0 %v340
        %v612 = vpop.f32.mrb[0].mxu0
        %v613 = vadd.f32 %v388, %v612
        %v614 = vpop.f32.mrb[0].mxu0
        %v615 = vadd.f32 %v392, %v614
        %v616 = vpop.f32.mrb[0].mxu0
        %v617 = vadd.f32 %v388, %v616
        %v618 = vpop.f32.mrb[0].mxu0
        %v619 = vadd.f32 %v392, %v618
        %620 = vmatprep.mubr.bf16.mxu0 0
        %621 = vmatmul.mubr.bf16.gmra.mrb[0].mxu0 %v341
        %v622 = vpop.f32.mrb[0].mxu0
        %v623 = vadd.f32 %v388, %v622
        %v624 = vpop.f32.mrb[0].mxu0
        %v625 = vadd.f32 %v392, %v624
        %v626 = vpop.f32.mrb[0].mxu0
        %v627 = vadd.f32 %v388, %v626
        %v628 = vpop.f32.mrb[0].mxu0
        %v629 = vadd.f32 %v392, %v628
        %630 = vmatprep.mubr.bf16.mxu0 0
        %631 = vmatmul.mubr.bf16.gmra.mrb[0].mxu0 %v342
        %v632 = vpop.f32.mrb[0].mxu0
        %v633 = vadd.f32 %v388, %v632
        %v634 = vpop.f32.mrb[0].mxu0
        %v635 = vadd.f32 %v392, %v634
        %v636 = vpop.f32.mrb[0].mxu0
        %v637 = vadd.f32 %v388, %v636
        %v638 = vpop.f32.mrb[0].mxu0
        %v639 = vadd.f32 %v392, %v638
        %640 = vmatprep.mubr.bf16.mxu0 0
        %641 = vmatmul.mubr.bf16.gmra.mrb[0].mxu0 %v343
        %v642 = vpop.f32.mrb[0].mxu0
        %v643 = vadd.f32 %v388, %v642
        %v644 = vpop.f32.mrb[0].mxu0
        %v645 = vadd.f32 %v392, %v644
        %v646 = vpop.f32.mrb[0].mxu0
        %v647 = vadd.f32 %v388, %v646
        %v648 = vpop.f32.mrb[0].mxu0
        %v649 = vadd.f32 %v392, %v648
        %650 = vmatprep.mubr.bf16.mxu0 0
        %651 = vmatmul.mubr.bf16.gmra.mrb[0].mxu0 %v344
        %v652 = vpop.f32.mrb[0].mxu0
        %v653 = vadd.f32 %v388, %v652
        %v654 = vpop.f32.mrb[0].mxu0
        %v655 = vadd.f32 %v392, %v654
        %v656 = vpop.f32.mrb[0].mxu0
        %v657 = vadd.f32 %v388, %v656
        %v658 = vpop.f32.mrb[0].mxu0
        %v659 = vadd.f32 %v392, %v658
        %660 = vmatprep.mubr.bf16.mxu0 0
        %661 = vmatmul.mubr.bf16.gmra.mrb[0].mxu0 %v345
        %v662 = vpop.f32.mrb[0].mxu0
        %v663 = vadd.f32 %v388, %v662
        %v664 = vpop.f32.mrb[0].mxu0
        %v665 = vadd.f32 %v392, %v664
        %v666 = vpop.f32.mrb[0].mxu0
        %v667 = vadd.f32 %v388, %v666
        %v668 = vpop.f32.mrb[0].mxu0
        %v669 = vadd.f32 %v392, %v668
        %670 = vmatprep.mubr.bf16.mxu0 0
        %671 = vmatmul.mubr.bf16.gmra.mrb[0].mxu0 %v346
        %v672 = vpop.f32.mrb[0].mxu0
        %v673 = vadd.f32 %v388, %v672
        %v674 = vpop.f32.mrb[0].mxu0
        %v675 = vadd.f32 %v392, %v674
        %v676 = vpop.f32.mrb[0].mxu0
        %v677 = vadd.f32 %v388, %v676
        %v678 = vpop.f32.mrb[0].mxu0
        %v679 = vadd.f32 %v392, %v678
        %680 = vmatprep.mubr.bf16.mxu0 0
        %681 = vmatmul.mubr.bf16.gmra.mrb[0].mxu0 %v347
        %v682 = vpop.f32.mrb[0].mxu0
        %v683 = vadd.f32 %v388, %v682
        %v684 = vpop.f32.mrb[0].mxu0
        %v685 = vadd.f32 %v392, %v684
        %v686 = vpop.f32.mrb[0].mxu0
        %v687 = vadd.f32 %v388, %v686
        %v688 = vpop.f32.mrb[0].mxu0
        %v689 = vadd.f32 %v392, %v688
        %690 = vmatprep.mubr.bf16.mxu0 0
        %691 = vmatmul.mubr.bf16.gmra.mrb[0].mxu0 %v348
        %v692 = vpop.f32.mrb[0].mxu0
        %v693 = vadd.f32 %v388, %v692
        %v694 = vpop.f32.mrb[0].mxu0
        %v695 = vadd.f32 %v392, %v694
        %v696 = vpop.f32.mrb[0].mxu0
        %v697 = vadd.f32 %v388, %v696
        %v698 = vpop.f32.mrb[0].mxu0
        %v699 = vadd.f32 %v392, %v698
        %700 = vmatprep.mubr.bf16.mxu0 0
        %701 = vmatmul.mubr.bf16.gmra.mrb[0].mxu0 %v349
        %v702 = vpop.f32.mrb[0].mxu0
        %v703 = vadd.f32 %v388, %v702
        %v704 = vpop.f32.mrb[0].mxu0
        %v705 = vadd.f32 %v392, %v704
        %v706 = vpop.f32.mrb[0].mxu0
        %v707 = vadd.f32 %v388, %v706
        %v708 = vpop.f32.mrb[0].mxu0
        %v709 = vadd.f32 %v392, %v708
        %710 = vmatprep.mubr.bf16.mxu0 0
        %711 = vmatmul.mubr.bf16.gmra.mrb[0].mxu0 %v350
        %v712 = vpop.f32.mrb[0].mxu0
        %v713 = vadd.f32 %v388, %v712
        %v714 = vpop.f32.mrb[0].mxu0
        %v715 = vadd.f32 %v392, %v714
        %v716 = vpop.f32.mrb[0].mxu0
        %v717 = vadd.f32 %v388, %v716
        %v718 = vpop.f32.mrb[0].mxu0
        %v719 = vadd.f32 %v392, %v718
        %720 = vdwg.mxu0
        %721 = vmatprep.subr.bf16.mxu0 0
        %722 = vmatpush1.bf16.msra.mxu0 %v482
        %723 = vmatprep.subr.bf16.mxu0 0
        %724 = vmatpush1.bf16.msra.mxu0 %v485
        %725 = vmatprep.subr.bf16.mxu0 0
        %726 = vmatpush1.bf16.msra.mxu0 %v488
        %727 = vmatprep.subr.bf16.mxu0 0
        %728 = vmatpush1.bf16.msra.mxu0 %v491
        %729 = vmatprep.subr.bf16.mxu0 0
        %730 = vmatpush1.bf16.msra.mxu0 %v494
        %731 = vmatprep.subr.bf16.mxu0 0
        %732 = vmatpush1.bf16.msra.mxu0 %v497
        %733 = vmatprep.subr.bf16.mxu0 0
        %734 = vmatpush1.bf16.msra.mxu0 %v500
        %735 = vmatprep.subr.bf16.mxu0 0
        %736 = vmatpush1.bf16.msra.mxu0 %v503
        %737 = vmatprep.subr.bf16.mxu0 0
        %738 = vmatpush1.bf16.msra.mxu0 0
        %739 = vmatprep.subr.bf16.mxu0 0
        %740 = vmatpush1.bf16.msra.mxu0 0
        %741 = vmatprep.subr.bf16.mxu0 0
        %742 = vmatpush1.bf16.msra.mxu0 0
        %743 = vmatprep.subr.bf16.mxu0 0
        %744 = vmatpush1.bf16.msra.mxu0 0
        %745 = vmatprep.subr.bf16.mxu0 0
        %746 = vmatpush1.bf16.msra.mxu0 0
        %747 = vmatprep.subr.bf16.mxu0 0
        %748 = vmatpush1.bf16.msra.mxu0 0
        %749 = vmatprep.subr.bf16.mxu0 0
        %750 = vmatpush1.bf16.msra.mxu0 0
        %751 = vmatprep.subr.bf16.mxu0 0
        %752 = vmatpush1.bf16.msra.mxu0 0
        %753 = vmatprep.mubr.bf16.mxu0 0
        %754 = vmatmul.mubr.bf16.gmra.mrb[0].mxu0 %v335
        %v755 = vpop.f32.mrb[0].mxu0
        %v756 = vadd.f32 %v396, %v755
        %v757 = vpop.f32.mrb[0].mxu0
        %v758 = vpop.f32.mrb[0].mxu0
        %v759 = vadd.f32 %v396, %v758
        %v760 = vpop.f32.mrb[0].mxu0
        %761 = vmatprep.mubr.bf16.mxu0 0
        %762 = vmatmul.mubr.bf16.gmra.mrb[0].mxu0 %v336
        %v763 = vpop.f32.mrb[0].mxu0
        %v764 = vadd.f32 %v396, %v763
        %v765 = vpop.f32.mrb[0].mxu0
        %v766 = vpop.f32.mrb[0].mxu0
        %v767 = vadd.f32 %v396, %v766
        %v768 = vpop.f32.mrb[0].mxu0
        %769 = vmatprep.mubr.bf16.mxu0 0
        %770 = vmatmul.mubr.bf16.gmra.mrb[0].mxu0 %v337
        %v771 = vpop.f32.mrb[0].mxu0
        %v772 = vadd.f32 %v396, %v771
        %v773 = vpop.f32.mrb[0].mxu0
        %v774 = vpop.f32.mrb[0].mxu0
        %v775 = vadd.f32 %v396, %v774
        %v776 = vpop.f32.mrb[0].mxu0
        %777 = vmatprep.mubr.bf16.mxu0 0
        %778 = vmatmul.mubr.bf16.gmra.mrb[0].mxu0 %v338
        %v779 = vpop.f32.mrb[0].mxu0
        %v780 = vadd.f32 %v396, %v779
        %v781 = vpop.f32.mrb[0].mxu0
        %v782 = vpop.f32.mrb[0].mxu0
        %v783 = vadd.f32 %v396, %v782
        %v784 = vpop.f32.mrb[0].mxu0
        %785 = vmatprep.mubr.bf16.mxu0 0
        %786 = vmatmul.mubr.bf16.gmra.mrb[0].mxu0 %v339
        %v787 = vpop.f32.mrb[0].mxu0
        %v788 = vadd.f32 %v396, %v787
        %v789 = vpop.f32.mrb[0].mxu0
        %v790 = vpop.f32.mrb[0].mxu0
        %v791 = vadd.f32 %v396, %v790
        %v792 = vpop.f32.mrb[0].mxu0
        %793 = vmatprep.mubr.bf16.mxu0 0
        %794 = vmatmul.mubr.bf16.gmra.mrb[0].mxu0 %v340
        %v795 = vpop.f32.mrb[0].mxu0
        %v796 = vadd.f32 %v396, %v795
        %v797 = vpop.f32.mrb[0].mxu0
        %v798 = vpop.f32.mrb[0].mxu0
        %v799 = vadd.f32 %v396, %v798
        %v800 = vpop.f32.mrb[0].mxu0
        %801 = vmatprep.mubr.bf16.mxu0 0
        %802 = vmatmul.mubr.bf16.gmra.mrb[0].mxu0 %v341
        %v803 = vpop.f32.mrb[0].mxu0
        %v804 = vadd.f32 %v396, %v803
        %v805 = vpop.f32.mrb[0].mxu0
        %v806 = vpop.f32.mrb[0].mxu0
        %v807 = vadd.f32 %v396, %v806
        %v808 = vpop.f32.mrb[0].mxu0
        %809 = vmatprep.mubr.bf16.mxu0 0
        %810 = vmatmul.mubr.bf16.gmra.mrb[0].mxu0 %v342
        %v811 = vpop.f32.mrb[0].mxu0
        %v812 = vadd.f32 %v396, %v811
        %v813 = vpop.f32.mrb[0].mxu0
        %v814 = vpop.f32.mrb[0].mxu0
        %v815 = vadd.f32 %v396, %v814
        %v816 = vpop.f32.mrb[0].mxu0
        %817 = vmatprep.mubr.bf16.mxu0 0
        %818 = vmatmul.mubr.bf16.gmra.mrb[0].mxu0 %v343
        %v819 = vpop.f32.mrb[0].mxu0
        %v820 = vadd.f32 %v396, %v819
        %v821 = vpop.f32.mrb[0].mxu0
        %v822 = vpop.f32.mrb[0].mxu0
        %v823 = vadd.f32 %v396, %v822
        %v824 = vpop.f32.mrb[0].mxu0
        %825 = vmatprep.mubr.bf16.mxu0 0
        %826 = vmatmul.mubr.bf16.gmra.mrb[0].mxu0 %v344
        %v827 = vpop.f32.mrb[0].mxu0
        %v828 = vadd.f32 %v396, %v827
        %v829 = vpop.f32.mrb[0].mxu0
        %v830 = vpop.f32.mrb[0].mxu0
        %v831 = vadd.f32 %v396, %v830
        %v832 = vpop.f32.mrb[0].mxu0
        %833 = vmatprep.mubr.bf16.mxu0 0
        %834 = vmatmul.mubr.bf16.gmra.mrb[0].mxu0 %v345
        %v835 = vpop.f32.mrb[0].mxu0
        %v836 = vadd.f32 %v396, %v835
        %v837 = vpop.f32.mrb[0].mxu0
        %v838 = vpop.f32.mrb[0].mxu0
        %v839 = vadd.f32 %v396, %v838
        %v840 = vpop.f32.mrb[0].mxu0
        %841 = vmatprep.mubr.bf16.mxu0 0
        %842 = vmatmul.mubr.bf16.gmra.mrb[0].mxu0 %v346
        %v843 = vpop.f32.mrb[0].mxu0
        %v844 = vadd.f32 %v396, %v843
        %v845 = vpop.f32.mrb[0].mxu0
        %v846 = vpop.f32.mrb[0].mxu0
        %v847 = vadd.f32 %v396, %v846
        %v848 = vpop.f32.mrb[0].mxu0
        %849 = vmatprep.mubr.bf16.mxu0 0
        %850 = vmatmul.mubr.bf16.gmra.mrb[0].mxu0 %v347
        %v851 = vpop.f32.mrb[0].mxu0
        %v852 = vadd.f32 %v396, %v851
        %v853 = vpop.f32.mrb[0].mxu0
        %v854 = vpop.f32.mrb[0].mxu0
        %v855 = vadd.f32 %v396, %v854
        %v856 = vpop.f32.mrb[0].mxu0
        %857 = vmatprep.mubr.bf16.mxu0 0
        %858 = vmatmul.mubr.bf16.gmra.mrb[0].mxu0 %v348
        %v859 = vpop.f32.mrb[0].mxu0
        %v860 = vadd.f32 %v396, %v859
        %v861 = vpop.f32.mrb[0].mxu0
        %v862 = vpop.f32.mrb[0].mxu0
        %v863 = vadd.f32 %v396, %v862
        %v864 = vpop.f32.mrb[0].mxu0
        %865 = vmatprep.mubr.bf16.mxu0 0
        %866 = vmatmul.mubr.bf16.gmra.mrb[0].mxu0 %v349
        %v867 = vpop.f32.mrb[0].mxu0
        %v868 = vadd.f32 %v396, %v867
        %v869 = vpop.f32.mrb[0].mxu0
        %v870 = vpop.f32.mrb[0].mxu0
        %v871 = vadd.f32 %v396, %v870
        %v872 = vpop.f32.mrb[0].mxu0
        %873 = vmatprep.mubr.bf16.mxu0 0
        %874 = vmatmul.mubr.bf16.gmra.mrb[0].mxu0 %v350
        %v875 = vpop.f32.mrb[0].mxu0
        %v876 = vadd.f32 %v396, %v875
        %v877 = vpop.f32.mrb[0].mxu0
        %v878 = vpop.f32.mrb[0].mxu0
        %v879 = vadd.f32 %v396, %v878
        %v880 = vpop.f32.mrb[0].mxu0
        %881 = vdwg.mxu0
        %v882 = vmul.f32 %v563, 0.17677669
        %v883 = vmul.f32 %v567, 0.17677669
        %v884 = vmul.f32 %v573, 0.17677669
        %v885 = vmul.f32 %v577, 0.17677669
        %v886 = vmul.f32 %v583, 0.17677669
        %v887 = vmul.f32 %v587, 0.17677669
        %v888 = vmul.f32 %v593, 0.17677669
        %v889 = vmul.f32 %v597, 0.17677669
        %v890 = vmul.f32 %v603, 0.17677669
        %v891 = vmul.f32 %v607, 0.17677669
        %v892 = vmul.f32 %v613, 0.17677669
        %v893 = vmul.f32 %v617, 0.17677669
        %v894 = vmul.f32 %v623, 0.17677669
        %v895 = vmul.f32 %v627, 0.17677669
        %v896 = vmul.f32 %v633, 0.17677669
        %v897 = vmul.f32 %v637, 0.17677669
        %v898 = vmul.f32 %v643, 0.17677669
        %v899 = vmul.f32 %v647, 0.17677669
        %v900 = vmul.f32 %v653, 0.17677669
        %v901 = vmul.f32 %v657, 0.17677669
        %v902 = vmul.f32 %v663, 0.17677669
        %v903 = vmul.f32 %v667, 0.17677669
        %v904 = vmul.f32 %v673, 0.17677669
        %v905 = vmul.f32 %v677, 0.17677669
        %v906 = vmul.f32 %v683, 0.17677669
        %v907 = vmul.f32 %v687, 0.17677669
        %v908 = vmul.f32 %v693, 0.17677669
        %v909 = vmul.f32 %v697, 0.17677669
        %v910 = vmul.f32 %v703, 0.17677669
        %v911 = vmul.f32 %v707, 0.17677669
        %v912 = vmul.f32 %v713, 0.17677669
        %v913 = vmul.f32 %v717, 0.17677669
        %v914 = vpack.c.bf16 %v883, %v882
        %v915 = vpack.c.bf16 %v885, %v884
        %v916 = vpack.c.bf16 %v887, %v886
        %v917 = vpack.c.bf16 %v889, %v888
        %v918 = vpack.c.bf16 %v891, %v890
        %v919 = vpack.c.bf16 %v893, %v892
        %v920 = vpack.c.bf16 %v895, %v894
        %v921 = vpack.c.bf16 %v897, %v896
        %v922 = vpack.c.bf16 %v899, %v898
        %v923 = vpack.c.bf16 %v901, %v900
        %v924 = vpack.c.bf16 %v903, %v902
        %v925 = vpack.c.bf16 %v905, %v904
        %v926 = vpack.c.bf16 %v907, %v906
        %v927 = vpack.c.bf16 %v909, %v908
        %v928 = vpack.c.bf16 %v911, %v910
        %v929 = vpack.c.bf16 %v913, %v912
        %v946 = vunpack.c.l.b16 %v914
        %v947 = vunpack.c.h.b16 %v914
        %v948 = vunpack.c.l.b16 %v915
        %v949 = vunpack.c.h.b16 %v915
        %v950 = vunpack.c.l.b16 %v916
        %v951 = vunpack.c.h.b16 %v916
        %v952 = vunpack.c.l.b16 %v917
        %v953 = vunpack.c.h.b16 %v917
        %v954 = vunpack.c.l.b16 %v918
        %v955 = vunpack.c.h.b16 %v918
        %v956 = vunpack.c.l.b16 %v919
        %v957 = vunpack.c.h.b16 %v919
        %v958 = vunpack.c.l.b16 %v920
        %v959 = vunpack.c.h.b16 %v920
        %v960 = vunpack.c.l.b16 %v921
        %v961 = vunpack.c.h.b16 %v921
        %v962 = vunpack.c.l.b16 %v922
        %v963 = vunpack.c.h.b16 %v922
        %v964 = vunpack.c.l.b16 %v923
        %v965 = vunpack.c.h.b16 %v923
        %v966 = vunpack.c.l.b16 %v924
        %v967 = vunpack.c.h.b16 %v924
        %v968 = vunpack.c.l.b16 %v925
        %v969 = vunpack.c.h.b16 %v925
        %v970 = vunpack.c.l.b16 %v926
        %v971 = vunpack.c.h.b16 %v926
        %v972 = vunpack.c.l.b16 %v927
        %v973 = vunpack.c.h.b16 %v927
        %v974 = vunpack.c.l.b16 %v928
        %v975 = vunpack.c.h.b16 %v928
        %v976 = vunpack.c.l.b16 %v929
        %v977 = vunpack.c.h.b16 %v929
        %v978 = vpack.c.b16 %v946, %v946
        %v979 = vpack.c.b16 %v947, %v947
        %v980 = vpack.c.b16 %v948, %v948
        %v981 = vpack.c.b16 %v949, %v949
        %v982 = vpack.c.b16 %v950, %v950
        %v983 = vpack.c.b16 %v951, %v951
        %v984 = vpack.c.b16 %v952, %v952
        %v985 = vpack.c.b16 %v953, %v953
        %v986 = vpack.c.b16 %v954, %v954
        %v987 = vpack.c.b16 %v955, %v955
        %v988 = vpack.c.b16 %v956, %v956
        %v989 = vpack.c.b16 %v957, %v957
        %v990 = vpack.c.b16 %v958, %v958
        %v991 = vpack.c.b16 %v959, %v959
        %v992 = vpack.c.b16 %v960, %v960
        %v993 = vpack.c.b16 %v961, %v961
        %v994 = vpack.c.b16 %v962, %v962
        %v995 = vpack.c.b16 %v963, %v963
        %v996 = vpack.c.b16 %v964, %v964
        %v997 = vpack.c.b16 %v965, %v965
        %v998 = vpack.c.b16 %v966, %v966
        %v999 = vpack.c.b16 %v967, %v967
        %v1000 = vpack.c.b16 %v968, %v968
        %v1001 = vpack.c.b16 %v969, %v969
        %v1002 = vpack.c.b16 %v970, %v970
        %v1003 = vpack.c.b16 %v971, %v971
        %v1004 = vpack.c.b16 %v972, %v972
        %v1005 = vpack.c.b16 %v973, %v973
        %v1006 = vpack.c.b16 %v974, %v974
        %v1007 = vpack.c.b16 %v975, %v975
        %v1008 = vpack.c.b16 %v976, %v976
        %v1009 = vpack.c.b16 %v977, %v977
        %1042 = vst [vmem:[%s283] sm:$0xf] %v978
        %1043 = vst [vmem:[%s283 + $0x4] sm:$0xf] %v979
        %1044 = vst [vmem:[%s283 + $0x8] sm:$0xf] %v980
        %1045 = vst [vmem:[%s283 + $0xc] sm:$0xf] %v981
        %1046 = vst [vmem:[%s283 + $0x10] sm:$0xf] %v982
        %1047 = vst [vmem:[%s283 + $0x14] sm:$0xf] %v983
        %1048 = vst [vmem:[%s283 + $0x18] sm:$0xf] %v984
        %1049 = vst [vmem:[%s283 + $0x1c] sm:$0xf] %v985
        %1050 = vst [vmem:[%s283 + $0x20] sm:$0xf] %v986
        %1051 = vst [vmem:[%s283 + $0x24] sm:$0xf] %v987
        %1052 = vst [vmem:[%s283 + $0x28] sm:$0xf] %v988
        %1053 = vst [vmem:[%s283 + $0x2c] sm:$0xf] %v989
        %1054 = vst [vmem:[%s283 + $0x30] sm:$0xf] %v990
        %1055 = vst [vmem:[%s283 + $0x34] sm:$0xf] %v991
        %1056 = vst [vmem:[%s283 + $0x38] sm:$0xf] %v992
        %1057 = vst [vmem:[%s283 + $0x3c] sm:$0xf] %v993
        %1058 = vst [vmem:[%s283 + $0x40] sm:$0xf] %v994
        %1059 = vst [vmem:[%s283 + $0x44] sm:$0xf] %v995
        %1060 = vst [vmem:[%s283 + $0x48] sm:$0xf] %v996
        %1061 = vst [vmem:[%s283 + $0x4c] sm:$0xf] %v997
        %1062 = vst [vmem:[%s283 + $0x50] sm:$0xf] %v998
        %1063 = vst [vmem:[%s283 + $0x54] sm:$0xf] %v999
        %1064 = vst [vmem:[%s283 + $0x58] sm:$0xf] %v1000
        %1065 = vst [vmem:[%s283 + $0x5c] sm:$0xf] %v1001
        %1066 = vst [vmem:[%s283 + $0x60] sm:$0xf] %v1002
        %1067 = vst [vmem:[%s283 + $0x64] sm:$0xf] %v1003
        %1068 = vst [vmem:[%s283 + $0x68] sm:$0xf] %v1004
        %1069 = vst [vmem:[%s283 + $0x6c] sm:$0xf] %v1005
        %1070 = vst [vmem:[%s283 + $0x70] sm:$0xf] %v1006
        %1071 = vst [vmem:[%s283 + $0x74] sm:$0xf] %v1007
        %1072 = vst [vmem:[%s283 + $0x78] sm:$0xf] %v1008
        %1073 = vst [vmem:[%s283 + $0x7c] sm:$0xf] %v1009
        %v1074 = vpack.c.bf16 %v569, %v565
        %v1075 = vpack.c.bf16 %v579, %v575
        %v1076 = vpack.c.bf16 %v589, %v585
        %v1077 = vpack.c.bf16 %v599, %v595
        %v1078 = vpack.c.bf16 %v609, %v605
        %v1079 = vpack.c.bf16 %v619, %v615
        %v1080 = vpack.c.bf16 %v629, %v625
        %v1081 = vpack.c.bf16 %v639, %v635
        %v1082 = vpack.c.bf16 %v649, %v645
        %v1083 = vpack.c.bf16 %v659, %v655
        %v1084 = vpack.c.bf16 %v669, %v665
        %v1085 = vpack.c.bf16 %v679, %v675
        %v1086 = vpack.c.bf16 %v689, %v685
        %v1087 = vpack.c.bf16 %v699, %v695
        %v1088 = vpack.c.bf16 %v709, %v705
        %v1089 = vpack.c.bf16 %v719, %v715
        %v1106 = vunpack.c.l.b16 %v1074
        %v1107 = vunpack.c.h.b16 %v1074
        %v1108 = vunpack.c.l.b16 %v1075
        %v1109 = vunpack.c.h.b16 %v1075
        %v1110 = vunpack.c.l.b16 %v1076
        %v1111 = vunpack.c.h.b16 %v1076
        %v1112 = vunpack.c.l.b16 %v1077
        %v1113 = vunpack.c.h.b16 %v1077
        %v1114 = vunpack.c.l.b16 %v1078
        %v1115 = vunpack.c.h.b16 %v1078
        %v1116 = vunpack.c.l.b16 %v1079
        %v1117 = vunpack.c.h.b16 %v1079
        %v1118 = vunpack.c.l.b16 %v1080
        %v1119 = vunpack.c.h.b16 %v1080
        %v1120 = vunpack.c.l.b16 %v1081
        %v1121 = vunpack.c.h.b16 %v1081
        %v1122 = vunpack.c.l.b16 %v1082
        %v1123 = vunpack.c.h.b16 %v1082
        %v1124 = vunpack.c.l.b16 %v1083
        %v1125 = vunpack.c.h.b16 %v1083
        %v1126 = vunpack.c.l.b16 %v1084
        %v1127 = vunpack.c.h.b16 %v1084
        %v1128 = vunpack.c.l.b16 %v1085
        %v1129 = vunpack.c.h.b16 %v1085
        %v1130 = vunpack.c.l.b16 %v1086
        %v1131 = vunpack.c.h.b16 %v1086
        %v1132 = vunpack.c.l.b16 %v1087
        %v1133 = vunpack.c.h.b16 %v1087
        %v1134 = vunpack.c.l.b16 %v1088
        %v1135 = vunpack.c.h.b16 %v1088
        %v1136 = vunpack.c.l.b16 %v1089
        %v1137 = vunpack.c.h.b16 %v1089
        %v1138 = vpack.c.b16 %v1106, %v1106
        %v1139 = vpack.c.b16 %v1107, %v1107
        %v1140 = vpack.c.b16 %v1108, %v1108
        %v1141 = vpack.c.b16 %v1109, %v1109
        %v1142 = vpack.c.b16 %v1110, %v1110
        %v1143 = vpack.c.b16 %v1111, %v1111
        %v1144 = vpack.c.b16 %v1112, %v1112
        %v1145 = vpack.c.b16 %v1113, %v1113
        %v1146 = vpack.c.b16 %v1114, %v1114
        %v1147 = vpack.c.b16 %v1115, %v1115
        %v1148 = vpack.c.b16 %v1116, %v1116
        %v1149 = vpack.c.b16 %v1117, %v1117
        %v1150 = vpack.c.b16 %v1118, %v1118
        %v1151 = vpack.c.b16 %v1119, %v1119
        %v1152 = vpack.c.b16 %v1120, %v1120
        %v1153 = vpack.c.b16 %v1121, %v1121
        %v1154 = vpack.c.b16 %v1122, %v1122
        %v1155 = vpack.c.b16 %v1123, %v1123
        %v1156 = vpack.c.b16 %v1124, %v1124
        %v1157 = vpack.c.b16 %v1125, %v1125
        %v1158 = vpack.c.b16 %v1126, %v1126
        %v1159 = vpack.c.b16 %v1127, %v1127
        %v1160 = vpack.c.b16 %v1128, %v1128
        %v1161 = vpack.c.b16 %v1129, %v1129
        %v1162 = vpack.c.b16 %v1130, %v1130
        %v1163 = vpack.c.b16 %v1131, %v1131
        %v1164 = vpack.c.b16 %v1132, %v1132
        %v1165 = vpack.c.b16 %v1133, %v1133
        %v1166 = vpack.c.b16 %v1134, %v1134
        %v1167 = vpack.c.b16 %v1135, %v1135
        %v1168 = vpack.c.b16 %v1136, %v1136
        %v1169 = vpack.c.b16 %v1137, %v1137
        %1202 = vst [vmem:[%s290] sm:$0xf] %v1138
        %1203 = vst [vmem:[%s290 + $0x4] sm:$0xf] %v1139
        %1204 = vst [vmem:[%s290 + $0x8] sm:$0xf] %v1140
        %1205 = vst [vmem:[%s290 + $0xc] sm:$0xf] %v1141
        %1206 = vst [vmem:[%s290 + $0x10] sm:$0xf] %v1142
        %1207 = vst [vmem:[%s290 + $0x14] sm:$0xf] %v1143
        %1208 = vst [vmem:[%s290 + $0x18] sm:$0xf] %v1144
        %1209 = vst [vmem:[%s290 + $0x1c] sm:$0xf] %v1145
        %1210 = vst [vmem:[%s290 + $0x20] sm:$0xf] %v1146
        %1211 = vst [vmem:[%s290 + $0x24] sm:$0xf] %v1147
        %1212 = vst [vmem:[%s290 + $0x28] sm:$0xf] %v1148
        %1213 = vst [vmem:[%s290 + $0x2c] sm:$0xf] %v1149
        %1214 = vst [vmem:[%s290 + $0x30] sm:$0xf] %v1150
        %1215 = vst [vmem:[%s290 + $0x34] sm:$0xf] %v1151
        %1216 = vst [vmem:[%s290 + $0x38] sm:$0xf] %v1152
        %1217 = vst [vmem:[%s290 + $0x3c] sm:$0xf] %v1153
        %1218 = vst [vmem:[%s290 + $0x40] sm:$0xf] %v1154
        %1219 = vst [vmem:[%s290 + $0x44] sm:$0xf] %v1155
        %1220 = vst [vmem:[%s290 + $0x48] sm:$0xf] %v1156
        %1221 = vst [vmem:[%s290 + $0x4c] sm:$0xf] %v1157
        %1222 = vst [vmem:[%s290 + $0x50] sm:$0xf] %v1158
        %1223 = vst [vmem:[%s290 + $0x54] sm:$0xf] %v1159
        %1224 = vst [vmem:[%s290 + $0x58] sm:$0xf] %v1160
        %1225 = vst [vmem:[%s290 + $0x5c] sm:$0xf] %v1161
        %1226 = vst [vmem:[%s290 + $0x60] sm:$0xf] %v1162
        %1227 = vst [vmem:[%s290 + $0x64] sm:$0xf] %v1163
        %1228 = vst [vmem:[%s290 + $0x68] sm:$0xf] %v1164
        %1229 = vst [vmem:[%s290 + $0x6c] sm:$0xf] %v1165
        %1230 = vst [vmem:[%s290 + $0x70] sm:$0xf] %v1166
        %1231 = vst [vmem:[%s290 + $0x74] sm:$0xf] %v1167
        %1232 = vst [vmem:[%s290 + $0x78] sm:$0xf] %v1168
        %1233 = vst [vmem:[%s290 + $0x7c] sm:$0xf] %v1169
        %v1234 = vpack.c.bf16 %v759, %v756
        %v1235 = vpack.c.bf16 %v767, %v764
        %v1236 = vpack.c.bf16 %v775, %v772
        %v1237 = vpack.c.bf16 %v783, %v780
        %v1238 = vpack.c.bf16 %v791, %v788
        %v1239 = vpack.c.bf16 %v799, %v796
        %v1240 = vpack.c.bf16 %v807, %v804
        %v1241 = vpack.c.bf16 %v815, %v812
        %v1242 = vpack.c.bf16 %v823, %v820
        %v1243 = vpack.c.bf16 %v831, %v828
        %v1244 = vpack.c.bf16 %v839, %v836
        %v1245 = vpack.c.bf16 %v847, %v844
        %v1246 = vpack.c.bf16 %v855, %v852
        %v1247 = vpack.c.bf16 %v863, %v860
        %v1248 = vpack.c.bf16 %v871, %v868
        %v1249 = vpack.c.bf16 %v879, %v876
        %v1266 = vunpack.c.l.b16 %v1234
        %v1267 = vunpack.c.h.b16 %v1234
        %v1268 = vunpack.c.l.b16 %v1235
        %v1269 = vunpack.c.h.b16 %v1235
        %v1270 = vunpack.c.l.b16 %v1236
        %v1271 = vunpack.c.h.b16 %v1236
        %v1272 = vunpack.c.l.b16 %v1237
        %v1273 = vunpack.c.h.b16 %v1237
        %v1274 = vunpack.c.l.b16 %v1238
        %v1275 = vunpack.c.h.b16 %v1238
        %v1276 = vunpack.c.l.b16 %v1239
        %v1277 = vunpack.c.h.b16 %v1239
        %v1278 = vunpack.c.l.b16 %v1240
        %v1279 = vunpack.c.h.b16 %v1240
        %v1280 = vunpack.c.l.b16 %v1241
        %v1281 = vunpack.c.h.b16 %v1241
        %v1282 = vunpack.c.l.b16 %v1242
        %v1283 = vunpack.c.h.b16 %v1242
        %v1284 = vunpack.c.l.b16 %v1243
        %v1285 = vunpack.c.h.b16 %v1243
        %v1286 = vunpack.c.l.b16 %v1244
        %v1287 = vunpack.c.h.b16 %v1244
        %v1288 = vunpack.c.l.b16 %v1245
        %v1289 = vunpack.c.h.b16 %v1245
        %v1290 = vunpack.c.l.b16 %v1246
        %v1291 = vunpack.c.h.b16 %v1246
        %v1292 = vunpack.c.l.b16 %v1247
        %v1293 = vunpack.c.h.b16 %v1247
        %v1294 = vunpack.c.l.b16 %v1248
        %v1295 = vunpack.c.h.b16 %v1248
        %v1296 = vunpack.c.l.b16 %v1249
        %v1297 = vunpack.c.h.b16 %v1249
        %v1298 = vpack.c.b16 %v1266, %v1266
        %v1299 = vpack.c.b16 %v1267, %v1267
        %v1300 = vpack.c.b16 %v1268, %v1268
        %v1301 = vpack.c.b16 %v1269, %v1269
        %v1302 = vpack.c.b16 %v1270, %v1270
        %v1303 = vpack.c.b16 %v1271, %v1271
        %v1304 = vpack.c.b16 %v1272, %v1272
        %v1305 = vpack.c.b16 %v1273, %v1273
        %v1306 = vpack.c.b16 %v1274, %v1274
        %v1307 = vpack.c.b16 %v1275, %v1275
        %v1308 = vpack.c.b16 %v1276, %v1276
        %v1309 = vpack.c.b16 %v1277, %v1277
        %v1310 = vpack.c.b16 %v1278, %v1278
        %v1311 = vpack.c.b16 %v1279, %v1279
        %v1312 = vpack.c.b16 %v1280, %v1280
        %v1313 = vpack.c.b16 %v1281, %v1281
        %v1314 = vpack.c.b16 %v1282, %v1282
        %v1315 = vpack.c.b16 %v1283, %v1283
        %v1316 = vpack.c.b16 %v1284, %v1284
        %v1317 = vpack.c.b16 %v1285, %v1285
        %v1318 = vpack.c.b16 %v1286, %v1286
        %v1319 = vpack.c.b16 %v1287, %v1287
        %v1320 = vpack.c.b16 %v1288, %v1288
        %v1321 = vpack.c.b16 %v1289, %v1289
        %v1322 = vpack.c.b16 %v1290, %v1290
        %v1323 = vpack.c.b16 %v1291, %v1291
        %v1324 = vpack.c.b16 %v1292, %v1292
        %v1325 = vpack.c.b16 %v1293, %v1293
        %v1326 = vpack.c.b16 %v1294, %v1294
        %v1327 = vpack.c.b16 %v1295, %v1295
        %v1328 = vpack.c.b16 %v1296, %v1296
        %v1329 = vpack.c.b16 %v1297, %v1297
        %1362 = vst [vmem:[%s297] sm:$0xf] %v1298
        %1363 = vst [vmem:[%s297 + $0x4] sm:$0xf] %v1299
        %1364 = vst [vmem:[%s297 + $0x8] sm:$0xf] %v1300
        %1365 = vst [vmem:[%s297 + $0xc] sm:$0xf] %v1301
        %1366 = vst [vmem:[%s297 + $0x10] sm:$0xf] %v1302
        %1367 = vst [vmem:[%s297 + $0x14] sm:$0xf] %v1303
        %1368 = vst [vmem:[%s297 + $0x18] sm:$0xf] %v1304
        %1369 = vst [vmem:[%s297 + $0x1c] sm:$0xf] %v1305
        %1370 = vst [vmem:[%s297 + $0x20] sm:$0xf] %v1306
        %1371 = vst [vmem:[%s297 + $0x24] sm:$0xf] %v1307
        %1372 = vst [vmem:[%s297 + $0x28] sm:$0xf] %v1308
        %1373 = vst [vmem:[%s297 + $0x2c] sm:$0xf] %v1309
        %1374 = vst [vmem:[%s297 + $0x30] sm:$0xf] %v1310
        %1375 = vst [vmem:[%s297 + $0x34] sm:$0xf] %v1311
        %1376 = vst [vmem:[%s297 + $0x38] sm:$0xf] %v1312
        %1377 = vst [vmem:[%s297 + $0x3c] sm:$0xf] %v1313
        %1378 = vst [vmem:[%s297 + $0x40] sm:$0xf] %v1314
        %1379 = vst [vmem:[%s297 + $0x44] sm:$0xf] %v1315
        %1380 = vst [vmem:[%s297 + $0x48] sm:$0xf] %v1316
        %1381 = vst [vmem:[%s297 + $0x4c] sm:$0xf] %v1317
        %1382 = vst [vmem:[%s297 + $0x50] sm:$0xf] %v1318
        %1383 = vst [vmem:[%s297 + $0x54] sm:$0xf] %v1319
        %1384 = vst [vmem:[%s297 + $0x58] sm:$0xf] %v1320
        %1385 = vst [vmem:[%s297 + $0x5c] sm:$0xf] %v1321
        %1386 = vst [vmem:[%s297 + $0x60] sm:$0xf] %v1322
        %1387 = vst [vmem:[%s297 + $0x64] sm:$0xf] %v1323
        %1388 = vst [vmem:[%s297 + $0x68] sm:$0xf] %v1324
        %1389 = vst [vmem:[%s297 + $0x6c] sm:$0xf] %v1325
        %1390 = vst [vmem:[%s297 + $0x70] sm:$0xf] %v1326
        %1391 = vst [vmem:[%s297 + $0x74] sm:$0xf] %v1327
        %1392 = vst [vmem:[%s297 + $0x78] sm:$0xf] %v1328
        %1393 = vst [vmem:[%s297 + $0x7c] sm:$0xf] %v1329
        %s1394 = sand.u32 %s119, 1
        %s1395 = scalar_lea.sflag [#allocation4], %s1394
        %s1396 = sand.u32 %s119, 1
        %s1397 = smul.addr %s1396, 128
        %s1398 = scalar_lea.vmem [#allocation7], %s1397
        %s1399 = sand.u32 %s27, 1
        %s1400 = scalar_lea.sflag [#allocation9], %s1399
        %s1401 = sand.u32 %s147, 1
        %s1402 = smul.addr %s1401, 128
        %s1403 = scalar_lea.vmem [#allocation8], %s1402
        %s1404 = sand.u32 %s27, 1
        %s1405 = scalar_lea.sflag [#allocation9], %s1404
        %s1406 = sand.u32 %s175, 1
        %s1407 = smul.addr %s1406, 128
        %s1408 = scalar_lea.vmem [#allocation10], %s1407
        // Predicated region
        $region41: #{tpu_custom_call.1} parent=31 // pred_check
          %p1409 = pneg %p129
        $region42: #{tpu_custom_call.1} parent=31 // pred_check_branch
          %1411 = sbr.rel (%p1409) target = $region44
        $region43: #{tpu_custom_call.1} parent=31 // pred_region
          %s1412 = smul.u32 32, %s32
          %s1414 = ssub.s32 2048, 2048
          %1415 = vsyncadd %s1395, %s1414
          %s1416 = smul.addr %s31, 32
          %s1417 = sadd.s32 %s1412, %s1416
          %s1418 = smul.addr %s1417, 64
          %s1419 = scalar_lea.hbm %s3, %s1418
          %s1420 = sshll.u32 %s1398, 4
          %s1421 = int_to_ptr.vmem [resolvable:$true] %s1420
          %1426 = dma.vmem_to_hbm [thread:$0]  %s1421, 2048, %s1419, %s1395, 64, 64, 4
        $region44: #{tpu_custom_call.1} parent=31 // pred_fallthru
          _
        // Predicated region
        $region45: #{tpu_custom_call.1} parent=31 // pred_check
          %p1427 = pneg %p157
        $region46: #{tpu_custom_call.1} parent=31 // pred_check_branch
          %1429 = sbr.rel (%p1427) target = $region48
        $region47: #{tpu_custom_call.1} parent=31 // pred_region
          %s1430 = smul.u32 32, %s32
          %s1432 = ssub.s32 2048, 2048
          %1433 = vsyncadd %s1400, %s1432
          %s1434 = smul.addr %s31, 32
          %s1435 = sadd.s32 %s1430, %s1434
          %s1436 = smul.addr %s1435, 64
          %s1437 = scalar_lea.hbm %s4, %s1436
          %s1438 = sshll.u32 %s1403, 4
          %s1439 = int_to_ptr.vmem [resolvable:$true] %s1438
          %1444 = dma.vmem_to_hbm [thread:$0]  %s1439, 2048, %s1437, %s1400, 64, 64, 4
        $region48: #{tpu_custom_call.1} parent=31 // pred_fallthru
          _
        // Predicated region
        $region49: #{tpu_custom_call.1} parent=31 // pred_check
          %p1445 = pneg %p185
        $region50: #{tpu_custom_call.1} parent=31 // pred_check_branch
          %1447 = sbr.rel (%p1445) target = $region52
        $region51: #{tpu_custom_call.1} parent=31 // pred_region
          %s1448 = smul.u32 32, %s32
          %s1450 = ssub.s32 2048, 2048
          %1451 = vsyncadd %s1405, %s1450
          %s1452 = smul.addr %s31, 32
          %s1453 = sadd.s32 %s1448, %s1452
          %s1454 = smul.addr %s1453, 64
          %s1455 = scalar_lea.hbm %s5, %s1454
          %s1456 = sshll.u32 %s1408, 4
          %s1457 = int_to_ptr.vmem [resolvable:$true] %s1456
          %1462 = dma.vmem_to_hbm [thread:$0]  %s1457, 2048, %s1455, %s1405, 64, 64, 4
        $region52: #{tpu_custom_call.1} parent=31 // pred_fallthru
          _
      $region32: #{tpu_custom_call.1} parent=5 // pred_fallthru
        _
      %p1463 = scmp.le.s32.totalorder 2, %s22
      // Predicated region
      $region53: #{tpu_custom_call.1} parent=5 // pred_check
        %p1464 = pneg %p1463
      $region54: #{tpu_custom_call.1} parent=5 // pred_check_branch
        %1466 = sbr.rel (%p1464) target = $region56
      $region55: #{tpu_custom_call.1} parent=5 // pred_region
        %s1467 = ssub.s32 %s22, 2
        // Predicated region
        $region57: #{tpu_custom_call.1} parent=55 // pred_check
          %p1468 = pneg %p135
        $region58: #{tpu_custom_call.1} parent=55 // pred_check_branch
          %1470 = sbr.rel (%p1468) target = $region60
        $region59: #{tpu_custom_call.1} parent=55 // pred_region
          %s1471 = sand.u32 %s120, 1
          %s1472 = scalar_lea.sflag [#allocation4], %s1471
          %s1473 = sand.u32 %s120, 1
          %s1474 = smul.addr %s1473, 128
          %s1475 = scalar_lea.vmem [#allocation7], %s1474
          %1476 = dma.done %s1472, 2048
        $region60: #{tpu_custom_call.1} parent=55 // pred_fallthru
          _
        // Predicated region
        $region61: #{tpu_custom_call.1} parent=55 // pred_check
          %p1477 = pneg %p163
        $region62: #{tpu_custom_call.1} parent=55 // pred_check_branch
          %1479 = sbr.rel (%p1477) target = $region64
        $region63: #{tpu_custom_call.1} parent=55 // pred_region
          %s1480 = sand.u32 %s28, 1
          %s1481 = scalar_lea.sflag [#allocation9], %s1480
          %s1482 = sand.u32 %s148, 1
          %s1483 = smul.addr %s1482, 128
          %s1484 = scalar_lea.vmem [#allocation8], %s1483
          %1485 = dma.done %s1481, 2048
        $region64: #{tpu_custom_call.1} parent=55 // pred_fallthru
          _
        // Predicated region
        $region65: #{tpu_custom_call.1} parent=55 // pred_check
          %p1486 = pneg %p191
        $region66: #{tpu_custom_call.1} parent=55 // pred_check_branch
          %1488 = sbr.rel (%p1486) target = $region68
        $region67: #{tpu_custom_call.1} parent=55 // pred_region
          %s1489 = sand.u32 %s28, 1
          %s1490 = scalar_lea.sflag [#allocation9], %s1489
          %s1491 = sand.u32 %s176, 1
          %s1492 = smul.addr %s1491, 128
          %s1493 = scalar_lea.vmem [#allocation10], %s1492
          %1494 = dma.done %s1490, 2048
        $region68: #{tpu_custom_call.1} parent=55 // pred_fallthru
          _
      $region56: #{tpu_custom_call.1} parent=5 // pred_fallthru
        _
    $region6: #{tpu_custom_call.1} parent=1 // loop_footer
      %s26 = sadd.s32 1, %s22
    $region7: #{tpu_custom_call.1} parent=1 // loop_footer_branch
      %21 = sbr.rel target = $region3
    $region8: #{tpu_custom_call.1} parent=1 // loop_exit
      _
    %1495 = vsyncpa [#allocation3], 1
    %s1496 = scalar_lea.sflag [#allocation3], 1
    %1497 = vsyncpa %s1496, 1
    %1498 = vsyncpa [#allocation6], 1
    %1499 = vsyncpa [#allocation4], 1
    %s1500 = scalar_lea.sflag [#allocation4], 1
    %1501 = vsyncpa %s1500, 1
    %1502 = vsyncpa [#allocation9], 1
    %s1503 = scalar_lea.sflag [#allocation9], 1
    %1504 = vsyncpa %s1503, 1

// kernel: tpu_custom_call.1
$region0: #{tpu_custom_call.1}
  #allocation0 [shape = 'u32[]', space=smem, size = 0x4, offset = 0x4, fixed_abs, tag = 'smem constant byte address 0x4 - core index']
  #allocation1 [shape = 'u32[144,128]{1,0:T(1,128)}', space=vmem, size = 0x12000, scoped, tag = 'internal scratch']
  %s0 = inlined_call_operand.hbm [shape: f32[2,256,128], index: 0, kind: input, shape index: {}]
  %s1 = inlined_call_operand.hbm [shape: bf16[128,384], index: 1, kind: input, shape index: {}]
  %s2 = inlined_call_operand.vmem [shape: f32[1,384], index: 2, kind: input, shape index: {}]
  %s3 = inlined_call_operand.hbm [shape: bf16[2,256,128], index: 3, kind: output, shape index: {0}]
  %s4 = inlined_call_operand.hbm [shape: bf16[2,256,128], index: 4, kind: output, shape index: {1}]
  %s5 = inlined_call_operand.hbm [shape: bf16[2,256,128], index: 5, kind: output, shape index: {2}]
  %6 = xla_tuple %s3, %s4, %s5
  %s7 = sld [smem:[#allocation0]]
  $region69: #{tpu_custom_call.1} parent=0
    _
  %s9 = ssub.s32 1, %s7
  %s10 = scalar_select 0, %s9, %s7
  $region1: #{tpu_custom_call.1} parent=0
    #allocation2 [shape = 'u8[262144]{0}', space=vmem, size = 0x40000, scoped, tag = 'input window, operand 0']
    #allocation3 [shape = 's32[2]{0}', space=sflag, size = 0x8, scoped, tag = 'scoped memory for tpu_custom_call.1']
    #allocation4 [shape = 's32[2]{0}', space=sflag, size = 0x8, scoped, tag = 'scoped memory for tpu_custom_call.1']
    #allocation5 [shape = 'u8[98304]{0}', space=vmem, size = 0x18000, scoped, tag = 'input window, operand 1, single buffered']
    #allocation6 [shape = 's32[1]{0}', space=sflag, size = 0x4, scoped, tag = 'scoped memory for tpu_custom_call.1']
    #allocation7 [shape = 'u8[131072]{0}', space=vmem, size = 0x20000, scoped, tag = 'output window, operand 0']
    #allocation8 [shape = 'u8[131072]{0}', space=vmem, size = 0x20000, scoped, tag = 'output window, operand 1']
    #allocation9 [shape = 's32[2]{0}', space=sflag, size = 0x8, scoped, tag = 'scoped memory for tpu_custom_call.1']
    #allocation10 [shape = 'u8[131072]{0}', space=vmem, size = 0x20000, scoped, tag = 'output window, operand 2']
    %11 = vsyncpa [#allocation3], 0
    %s12 = scalar_lea.sflag [#allocation3], 1
    %13 = vsyncpa %s12, 0
    %14 = vsyncpa [#allocation6], 0
    %15 = vsyncpa [#allocation4], 0
    %s16 = scalar_lea.sflag [#allocation4], 1
    %17 = vsyncpa %s16, 0
    %18 = vsyncpa [#allocation9], 0
    %s19 = scalar_lea.sflag [#allocation9], 1
    %20 = vsyncpa %s19, 0
    loop: start=0, step=1, limit=4
    $region2: #{tpu_custom_call.1} parent=1 // loop_pre_header
      _
    $region3: #{tpu_custom_call.1} parent=1 // loop_header
      %s22 = sphi 0, %s26
      %p23 = scmp.ge.s32.totalorder %s22, 4
      %s29 = sphi 0, %s41
      %s30 = sphi 0, %s37
      %s31 = sphi 0, %s29
      %s32 = sphi 0, %s30
      %s33 = sphi 0, %s31
      %s34 = sphi 0, %s32
      %s46 = sphi 0, %s48
      %s49 = sphi 0, %s46
      %s50 = sphi 0, %s49
      %s66 = sphi 0, %s50
      %s70 = sphi 0, %s70
      %s72 = sphi 0, %s70
      %s73 = sphi 0, %s72
      %s87 = sphi 0, %s73
      %s91 = sphi 0, %s91
      %s93 = sphi 0, %s91
      %s94 = sphi 0, %s93
      %s108 = sphi 0, %s94
      %s116 = sphi 0, %s118
      %s119 = sphi 0, %s116
      %s120 = sphi 0, %s119
      %s136 = sphi 0, %s120
      %s144 = sphi 0, %s146
      %s147 = sphi 0, %s144
      %s148 = sphi 0, %s147
      %s164 = sphi 0, %s148
      %s172 = sphi 0, %s174
      %s175 = sphi 0, %s172
      %s176 = sphi 0, %s175
      %s192 = sphi 0, %s176
    $region4: #{tpu_custom_call.1} parent=1 // loop_header_branch
      %25 = sbr.rel (%p23) target = $region8
    $region5: #{tpu_custom_call.1} parent=1 // loop_body
      %s27 = ssub.s32 %s22, 1
      %s28 = ssub.s32 %s22, 2
      %s35 = sadd.s32 1, %s30
      %p36 = scmp.ge.s32.totalorder %s35, 1
      %s37 = scalar_select %p36, 0, %s35
      %s38 = sadd.s32 1, %s29
      %s39 = scalar_select %p36, %s38, %s29
      %p40 = scmp.ge.s32.totalorder %s39, 2
      %s41 = scalar_select %p40, 0, %s39
      %s42 = ssub.s32 %s29, %s41
      %s43 = ssub.s32 %s30, %s37
      %s44 = sor.u32 %s42, %s43
      %p45 = scmp.eq.s32.totalorder %s44, 0
      %s47 = sadd.s32 %s46, 1
      %s48 = scalar_select %p45, %s46, %s47
      %p51 = pneg %p45
      %p52 = scmp.eq.s32.totalorder %s22, 1
      %p53 = por %p51, %p52
      %p54 = scmp.ne.s32.totalorder %s46, %s49
      %p55 = scmp.eq.s32.totalorder %s22, 0
      %p56 = por %p54, %p55
      %p57 = scmp.ne.s32.totalorder %s46, %s49
      %p58 = scmp.eq.s32.totalorder %s27, 1
      %p59 = por %p57, %p58
      %p60 = scmp.ne.s32.totalorder %s49, %s50
      %p61 = scmp.eq.s32.totalorder %s27, 0
      %p62 = por %p60, %p61
      %p63 = scmp.ne.s32.totalorder %s49, %s50
      %p64 = scmp.eq.s32.totalorder %s28, 1
      %p65 = por %p63, %p64
      %p67 = scmp.ne.s32.totalorder %s50, %s66
      %p68 = scmp.eq.s32.totalorder %s28, 0
      %p69 = por %p67, %p68
      %s71 = sadd.s32 %s70, 1
      %p74 = scmp.eq.s32.totalorder %s22, 1
      %p75 = scmp.ne.s32.totalorder %s70, %s72
      %p76 = scmp.eq.s32.totalorder %s22, 0
      %p77 = por %p75, %p76
      %p78 = scmp.ne.s32.totalorder %s70, %s72
      %p79 = scmp.eq.s32.totalorder %s27, 1
      %p80 = por %p78, %p79
      %p81 = scmp.ne.s32.totalorder %s72, %s73
      %p82 = scmp.eq.s32.totalorder %s27, 0
      %p83 = por %p81, %p82
      %p84 = scmp.ne.s32.totalorder %s72, %s73
      %p85 = scmp.eq.s32.totalorder %s28, 1
      %p86 = por %p84, %p85
      %p88 = scmp.ne.s32.totalorder %s73, %s87
      %p89 = scmp.eq.s32.totalorder %s28, 0
      %p90 = por %p88, %p89
      %s92 = sadd.s32 %s91, 1
      %p95 = scmp.eq.s32.totalorder %s22, 1
      %p96 = scmp.ne.s32.totalorder %s91, %s93
      %p97 = scmp.eq.s32.totalorder %s22, 0
      %p98 = por %p96, %p97
      %p99 = scmp.ne.s32.totalorder %s91, %s93
      %p100 = scmp.eq.s32.totalorder %s27, 1
      %p101 = por %p99, %p100
      %p102 = scmp.ne.s32.totalorder %s93, %s94
      %p103 = scmp.eq.s32.totalorder %s27, 0
      %p104 = por %p102, %p103
      %p105 = scmp.ne.s32.totalorder %s93, %s94
      %p106 = scmp.eq.s32.totalorder %s28, 1
      %p107 = por %p105, %p106
      %p109 = scmp.ne.s32.totalorder %s94, %s108
      %p110 = scmp.eq.s32.totalorder %s28, 0
      %p111 = por %p109, %p110
      %s112 = ssub.s32 %s29, %s41
      %s113 = ssub.s32 %s30, %s37
      %s114 = sor.u32 %s112, %s113
      %p115 = scmp.eq.s32.totalorder %s114, 0
      %s117 = sadd.s32 %s116, 1
      %s118 = scalar_select %p115, %s116, %s117
      %p121 = pneg %p115
      %p122 = scmp.eq.s32.totalorder %s22, 1
      %p123 = por %p121, %p122
      %p124 = scmp.ne.s32.totalorder %s116, %s119
      %p125 = scmp.eq.s32.totalorder %s22, 0
      %p126 = por %p124, %p125
      %p127 = scmp.ne.s32.totalorder %s116, %s119
      %p128 = scmp.eq.s32.totalorder %s27, 1
      %p129 = por %p127, %p128
      %p130 = scmp.ne.s32.totalorder %s119, %s120
      %p131 = scmp.eq.s32.totalorder %s27, 0
      %p132 = por %p130, %p131
      %p133 = scmp.ne.s32.totalorder %s119, %s120
      %p134 = scmp.eq.s32.totalorder %s28, 1
      %p135 = por %p133, %p134
      %p137 = scmp.ne.s32.totalorder %s120, %s136
      %p138 = scmp.eq.s32.totalorder %s28, 0
      %p139 = por %p137, %p138
      %s140 = ssub.s32 %s29, %s41
      %s141 = ssub.s32 %s30, %s37
      %s142 = sor.u32 %s140, %s141
      %p143 = scmp.eq.s32.totalorder %s142, 0
      %s145 = sadd.s32 %s144, 1
      %s146 = scalar_select %p143, %s144, %s145
      %p149 = pneg %p143
      %p150 = scmp.eq.s32.totalorder %s22, 1
      %p151 = por %p149, %p150
      %p152 = scmp.ne.s32.totalorder %s144, %s147
      %p153 = scmp.eq.s32.totalorder %s22, 0
      %p154 = por %p152, %p153
      %p155 = scmp.ne.s32.totalorder %s144, %s147
      %p156 = scmp.eq.s32.totalorder %s27, 1
      %p157 = por %p155, %p156
      %p158 = scmp.ne.s32.totalorder %s147, %s148
      %p159 = scmp.eq.s32.totalorder %s27, 0
      %p160 = por %p158, %p159
      %p161 = scmp.ne.s32.totalorder %s147, %s148
      %p162 = scmp.eq.s32.totalorder %s28, 1
      %p163 = por %p161, %p162
      %p165 = scmp.ne.s32.totalorder %s148, %s164
      %p166 = scmp.eq.s32.totalorder %s28, 0
      %p167 = por %p165, %p166
      %s168 = ssub.s32 %s29, %s41
      %s169 = ssub.s32 %s30, %s37
      %s170 = sor.u32 %s168, %s169
      %p171 = scmp.eq.s32.totalorder %s170, 0
      %s173 = sadd.s32 %s172, 1
      %s174 = scalar_select %p171, %s172, %s173
      %p177 = pneg %p171
      %p178 = scmp.eq.s32.totalorder %s22, 1
      %p179 = por %p177, %p178
      %p180 = scmp.ne.s32.totalorder %s172, %s175
      %p181 = scmp.eq.s32.totalorder %s22, 0
      %p182 = por %p180, %p181
      %p183 = scmp.ne.s32.totalorder %s172, %s175
      %p184 = scmp.eq.s32.totalorder %s27, 1
      %p185 = por %p183, %p184
      %p186 = scmp.ne.s32.totalorder %s175, %s176
      %p187 = scmp.eq.s32.totalorder %s27, 0
      %p188 = por %p186, %p187
      %p189 = scmp.ne.s32.totalorder %s175, %s176
      %p190 = scmp.eq.s32.totalorder %s28, 1
      %p191 = por %p189, %p190
      %p193 = scmp.ne.s32.totalorder %s176, %s192
      %p194 = scmp.eq.s32.totalorder %s28, 0
      %p195 = por %p193, %p194
      %p196 = scmp.le.s32.totalorder 1, %s22
      %p197 = scmp.lt.s32.totalorder %s22, 3
      %p198 = pnand %p196, %p197
      %p199 = pneg %p198
      // Predicated region
      $region9: #{tpu_custom_call.1} parent=5 // pred_check
        _
      $region10: #{tpu_custom_call.1} parent=5 // pred_check_branch
        %201 = sbr.rel (%p198) target = $region12
      $region11: #{tpu_custom_call.1} parent=5 // pred_region
        %s202 = ssub.s32 %s22, 1
        // Predicated region
        $region13: #{tpu_custom_call.1} parent=11 // pred_check
          %p203 = pneg %p83
        $region14: #{tpu_custom_call.1} parent=11 // pred_check_branch
          %205 = sbr.rel (%p203) target = $region16
        $region15: #{tpu_custom_call.1} parent=11 // pred_region
          %s207 = ssub.s32 3072, 3072
          %208 = vsyncadd [#allocation6], %s207
          %s209 = sshll.u32 [#allocation5], 4
          %s210 = int_to_ptr.vmem [resolvable:$true] %s209
          %215 = dma.hbm_to_vmem [thread:$0]  %s1, 3072, %s210, [#allocation6], 192, 192, 12
        $region16: #{tpu_custom_call.1} parent=11 // pred_fallthru
          _
        // Predicated region
        $region17: #{tpu_custom_call.1} parent=11 // pred_check
          %p216 = pneg %p104
        $region18: #{tpu_custom_call.1} parent=11 // pred_check_branch
          %218 = sbr.rel (%p216) target = $region20
        $region19: #{tpu_custom_call.1} parent=11 // pred_region
          _
        $region20: #{tpu_custom_call.1} parent=11 // pred_fallthru
          _
      $region12: #{tpu_custom_call.1} parent=5 // pred_fallthru
        _
      %p219 = scmp.lt.s32.totalorder %s22, 2
      // Predicated region
      $region21: #{tpu_custom_call.1} parent=5 // pred_check
        %p220 = pneg %p219
      $region22: #{tpu_custom_call.1} parent=5 // pred_check_branch
        %222 = sbr.rel (%p220) target = $region24
      $region23: #{tpu_custom_call.1} parent=5 // pred_region
        // Predicated region
        $region25: #{tpu_custom_call.1} parent=23 // pred_check
          %p223 = pneg %p56
        $region26: #{tpu_custom_call.1} parent=23 // pred_check_branch
          %225 = sbr.rel (%p223) target = $region28
        $region27: #{tpu_custom_call.1} parent=23 // pred_region
          %s226 = sand.u32 %s46, 1
          %s227 = scalar_lea.sflag [#allocation3], %s226
          %s228 = sand.u32 %s46, 1
          %s229 = smul.addr %s228, 256
          %s230 = scalar_lea.vmem [#allocation2], %s229
          %s231 = smul.u32 32, %s30
          %s233 = ssub.s32 4096, 4096
          %234 = vsyncadd %s227, %s233
          %s235 = smul.addr %s29, 32
          %s236 = sadd.s32 %s231, %s235
          %s237 = smul.addr %s236, 128
          %s238 = scalar_lea.hbm %s0, %s237
          %s239 = sshll.u32 %s230, 4
          %s240 = int_to_ptr.vmem [resolvable:$true] %s239
          %245 = dma.hbm_to_vmem [thread:$0]  %s238, 4096, %s240, %s227, 128, 128, 8
        $region28: #{tpu_custom_call.1} parent=23 // pred_fallthru
          _
      $region24: #{tpu_custom_call.1} parent=5 // pred_fallthru
        _
      %p246 = scmp.le.s32.totalorder 1, %s22
      %p247 = scmp.lt.s32.totalorder %s22, 3
      %p248 = pnand %p246, %p247
      %p249 = pneg %p248
      // Predicated region
      $region29: #{tpu_custom_call.1} parent=5 // pred_check
        _
      $region30: #{tpu_custom_call.1} parent=5 // pred_check_branch
        %251 = sbr.rel (%p248) target = $region32
      $region31: #{tpu_custom_call.1} parent=5 // pred_region
        %s252 = ssub.s32 %s22, 1
        %s253 = sand.u32 %s49, 1
        %s254 = scalar_lea.sflag [#allocation3], %s253
        %s255 = sand.u32 %s49, 1
        %s256 = smul.addr %s255, 256
        %s257 = scalar_lea.vmem [#allocation2], %s256
        // Predicated region
        $region33: #{tpu_custom_call.1} parent=31 // pred_check
          %p258 = pneg %p62
        $region34: #{tpu_custom_call.1} parent=31 // pred_check_branch
          %260 = sbr.rel (%p258) target = $region36
        $region35: #{tpu_custom_call.1} parent=31 // pred_region
          %261 = dma.done %s254, 4096
        $region36: #{tpu_custom_call.1} parent=31 // pred_fallthru
          _
        // Predicated region
        $region37: #{tpu_custom_call.1} parent=31 // pred_check
          %p262 = pneg %p83
        $region38: #{tpu_custom_call.1} parent=31 // pred_check_branch
          %264 = sbr.rel (%p262) target = $region40
        $region39: #{tpu_custom_call.1} parent=31 // pred_region
          %265 = dma.done [#allocation6], 3072
        $region40: #{tpu_custom_call.1} parent=31 // pred_fallthru
          _
        %s266 = sand.u32 %s49, 1
        %s267 = scalar_lea.sflag [#allocation3], %s266
        %s268 = sand.u32 %s49, 1
        %s269 = smul.addr %s268, 256
        %s270 = scalar_lea.vmem [#allocation2], %s269
        %p271 = pneg %p62
        %p272 = pneg %p59
        %p273 = pneg %p83
        %p274 = pneg %p80
        %p275 = pneg %p104
        %p276 = pneg %p101
        %p277 = pneg %p132
        %p278 = pneg %p129
        %s279 = sand.u32 %s119, 1
        %s280 = scalar_lea.sflag [#allocation4], %s279
        %s281 = sand.u32 %s119, 1
        %s282 = smul.addr %s281, 128
        %s283 = scalar_lea.vmem [#allocation7], %s282
        %p284 = pneg %p160
        %p285 = pneg %p157
        %s286 = sand.u32 %s27, 1
        %s287 = scalar_lea.sflag [#allocation9], %s286
        %s288 = sand.u32 %s147, 1
        %s289 = smul.addr %s288, 128
        %s290 = scalar_lea.vmem [#allocation8], %s289
        %p291 = pneg %p188
        %p292 = pneg %p185
        %s293 = sand.u32 %s27, 1
        %s294 = scalar_lea.sflag [#allocation9], %s293
        %s295 = sand.u32 %s175, 1
        %s296 = smul.addr %s295, 128
        %s297 = scalar_lea.vmem [#allocation10], %s296
        %s298 = smul.u32 32, %s32
        %s299 = smul.u32 32, %s32
        %s300 = smul.u32 32, %s32
        %s301 = smul.u32 32, %s32
        %v303 = vld [vmem:[%s257] sm:$0xff]
        %v304 = vld [vmem:[%s257 + $0x8] sm:$0xff]
        %v305 = vld [vmem:[%s257 + $0x10] sm:$0xff]
        %v306 = vld [vmem:[%s257 + $0x18] sm:$0xff]
        %v307 = vld [vmem:[%s257 + $0x20] sm:$0xff]
        %v308 = vld [vmem:[%s257 + $0x28] sm:$0xff]
        %v309 = vld [vmem:[%s257 + $0x30] sm:$0xff]
        %v310 = vld [vmem:[%s257 + $0x38] sm:$0xff]
        %v311 = vld [vmem:[%s257 + $0x40] sm:$0xff]
        %v312 = vld [vmem:[%s257 + $0x48] sm:$0xff]
        %v313 = vld [vmem:[%s257 + $0x50] sm:$0xff]
        %v314 = vld [vmem:[%s257 + $0x58] sm:$0xff]
        %v315 = vld [vmem:[%s257 + $0x60] sm:$0xff]
        %v316 = vld [vmem:[%s257 + $0x68] sm:$0xff]
        %v317 = vld [vmem:[%s257 + $0x70] sm:$0xff]
        %v318 = vld [vmem:[%s257 + $0x78] sm:$0xff]
        %v319 = vld [vmem:[%s257 + $0x80] sm:$0xff]
        %v320 = vld [vmem:[%s257 + $0x88] sm:$0xff]
        %v321 = vld [vmem:[%s257 + $0x90] sm:$0xff]
        %v322 = vld [vmem:[%s257 + $0x98] sm:$0xff]
        %v323 = vld [vmem:[%s257 + $0xa0] sm:$0xff]
        %v324 = vld [vmem:[%s257 + $0xa8] sm:$0xff]
        %v325 = vld [vmem:[%s257 + $0xb0] sm:$0xff]
        %v326 = vld [vmem:[%s257 + $0xb8] sm:$0xff]
        %v327 = vld [vmem:[%s257 + $0xc0] sm:$0xff]
        %v328 = vld [vmem:[%s257 + $0xc8] sm:$0xff]
        %v329 = vld [vmem:[%s257 + $0xd0] sm:$0xff]
        %v330 = vld [vmem:[%s257 + $0xd8] sm:$0xff]
        %v331 = vld [vmem:[%s257 + $0xe0] sm:$0xff]
        %v332 = vld [vmem:[%s257 + $0xe8] sm:$0xff]
        %v333 = vld [vmem:[%s257 + $0xf0] sm:$0xff]
        %v334 = vld [vmem:[%s257 + $0xf8] sm:$0xff]
        %v335 = vpack.c.bf16 %v304, %v303
        %v336 = vpack.c.bf16 %v306, %v305
        %v337 = vpack.c.bf16 %v308, %v307
        %v338 = vpack.c.bf16 %v310, %v309
        %v339 = vpack.c.bf16 %v312, %v311
        %v340 = vpack.c.bf16 %v314, %v313
        %v341 = vpack.c.bf16 %v316, %v315
        %v342 = vpack.c.bf16 %v318, %v317
        %v343 = vpack.c.bf16 %v320, %v319
        %v344 = vpack.c.bf16 %v322, %v321
        %v345 = vpack.c.bf16 %v324, %v323
        %v346 = vpack.c.bf16 %v326, %v325
        %v347 = vpack.c.bf16 %v328, %v327
        %v348 = vpack.c.bf16 %v330, %v329
        %v349 = vpack.c.bf16 %v332, %v331
        %v350 = vpack.c.bf16 %v334, %v333
        %v351 = vld [vmem:[#allocation5] sm:$0xff]
        %v352 = vld [vmem:[#allocation5 + $0x8] sm:$0xf]
        %v353 = vld [vmem:[#allocation5 + $0xc] sm:$0xff]
        %v354 = vld [vmem:[#allocation5 + $0x14] sm:$0xf]
        %v355 = vld [vmem:[#allocation5 + $0x18] sm:$0xff]
        %v356 = vld [vmem:[#allocation5 + $0x20] sm:$0xf]
        %v357 = vld [vmem:[#allocation5 + $0x24] sm:$0xff]
        %v358 = vld [vmem:[#allocation5 + $0x2c] sm:$0xf]
        %v359 = vld [vmem:[#allocation5 + $0x30] sm:$0xff]
        %v360 = vld [vmem:[#allocation5 + $0x38] sm:$0xf]
        %v361 = vld [vmem:[#allocation5 + $0x3c] sm:$0xff]
        %v362 = vld [vmem:[#allocation5 + $0x44] sm:$0xf]
        %v363 = vld [vmem:[#allocation5 + $0x48] sm:$0xff]
        %v364 = vld [vmem:[#allocation5 + $0x50] sm:$0xf]
        %v365 = vld [vmem:[#allocation5 + $0x54] sm:$0xff]
        %v366 = vld [vmem:[#allocation5 + $0x5c] sm:$0xf]
        %v367 = vld [vmem:[#allocation5 + $0x60] sm:$0xff]
        %v368 = vld [vmem:[#allocation5 + $0x68] sm:$0xf]
        %v369 = vld [vmem:[#allocation5 + $0x6c] sm:$0xff]
        %v370 = vld [vmem:[#allocation5 + $0x74] sm:$0xf]
        %v371 = vld [vmem:[#allocation5 + $0x78] sm:$0xff]
        %v372 = vld [vmem:[#allocation5 + $0x80] sm:$0xf]
        %v373 = vld [vmem:[#allocation5 + $0x84] sm:$0xff]
        %v374 = vld [vmem:[#allocation5 + $0x8c] sm:$0xf]
        %v375 = vld [vmem:[#allocation5 + $0x90] sm:$0xff]
        %v376 = vld [vmem:[#allocation5 + $0x98] sm:$0xf]
        %v377 = vld [vmem:[#allocation5 + $0x9c] sm:$0xff]
        %v378 = vld [vmem:[#allocation5 + $0xa4] sm:$0xf]
        %v379 = vld [vmem:[#allocation5 + $0xa8] sm:$0xff]
        %v380 = vld [vmem:[#allocation5 + $0xb0] sm:$0xf]
        %v381 = vld [vmem:[#allocation5 + $0xb4] sm:$0xff]
        %v382 = vld [vmem:[#allocation5 + $0xbc] sm:$0xf]
        %v383 = vld [vmem:[%s2] sm:$0x7]
        %v385 = vlaneseq
        %v386 = vshrl.u32 %v385, 7
        %v387 = vsub.s32 0, %v386
        %v388 = vrot.slane %v383, %v387
        %v389 = vlaneseq
        %v390 = vshrl.u32 %v389, 7
        %v391 = vsub.s32 1, %v390
        %v392 = vrot.slane %v383, %v391
        %v393 = vlaneseq
        %v394 = vshrl.u32 %v393, 7
        %v395 = vsub.s32 2, %v394
        %v396 = vrot.slane %v383, %v395
        %v432 = vunpack.c.l.b16 %v351
        %v433 = vunpack.c.h.b16 %v351
        %v434 = vunpack.c.l.b16 %v352
        %v435 = vunpack.c.l.b16 %v353
        %v436 = vunpack.c.h.b16 %v353
        %v437 = vunpack.c.l.b16 %v354
        %v438 = vunpack.c.l.b16 %v355
        %v439 = vunpack.c.h.b16 %v355
        %v440 = vunpack.c.l.b16 %v356
        %v441 = vunpack.c.l.b16 %v357
        %v442 = vunpack.c.h.b16 %v357
        %v443 = vunpack.c.l.b16 %v358
        %v444 = vunpack.c.l.b16 %v359
        %v445 = vunpack.c.h.b16 %v359
        %v446 = vunpack.c.l.b16 %v360
        %v447 = vunpack.c.l.b16 %v361
        %v448 = vunpack.c.h.b16 %v361
        %v449 = vunpack.c.l.b16 %v362
        %v450 = vunpack.c.l.b16 %v363
        %v451 = vunpack.c.h.b16 %v363
        %v452 = vunpack.c.l.b16 %v364
        %v453 = vunpack.c.l.b16 %v365
        %v454 = vunpack.c.h.b16 %v365
        %v455 = vunpack.c.l.b16 %v366
        %v456 = vunpack.c.l.b16 %v367
        %v457 = vunpack.c.h.b16 %v367
        %v458 = vunpack.c.l.b16 %v368
        %v459 = vunpack.c.l.b16 %v369
        %v460 = vunpack.c.h.b16 %v369
        %v461 = vunpack.c.l.b16 %v370
        %v462 = vunpack.c.l.b16 %v371
        %v463 = vunpack.c.h.b16 %v371
        %v464 = vunpack.c.l.b16 %v372
        %v465 = vunpack.c.l.b16 %v373
        %v466 = vunpack.c.h.b16 %v373
        %v467 = vunpack.c.l.b16 %v374
        %v468 = vunpack.c.l.b16 %v375
        %v469 = vunpack.c.h.b16 %v375
        %v470 = vunpack.c.l.b16 %v376
        %v471 = vunpack.c.l.b16 %v377
        %v472 = vunpack.c.h.b16 %v377
        %v473 = vunpack.c.l.b16 %v378
        %v474 = vunpack.c.l.b16 %v379
        %v475 = vunpack.c.h.b16 %v379
        %v476 = vunpack.c.l.b16 %v380
        %v477 = vunpack.c.l.b16 %v381
        %v478 = vunpack.c.h.b16 %v381
        %v479 = vunpack.c.l.b16 %v382
        %v480 = vpack.c.b16 %v435, %v432
        %v481 = vpack.c.b16 %v436, %v433
        %v482 = vpack.c.b16 %v437, %v434
        %v483 = vpack.c.b16 %v441, %v438
        %v484 = vpack.c.b16 %v442, %v439
        %v485 = vpack.c.b16 %v443, %v440
        %v486 = vpack.c.b16 %v447, %v444
        %v487 = vpack.c.b16 %v448, %v445
        %v488 = vpack.c.b16 %v449, %v446
        %v489 = vpack.c.b16 %v453, %v450
        %v490 = vpack.c.b16 %v454, %v451
        %v491 = vpack.c.b16 %v455, %v452
        %v492 = vpack.c.b16 %v459, %v456
        %v493 = vpack.c.b16 %v460, %v457
        %v494 = vpack.c.b16 %v461, %v458
        %v495 = vpack.c.b16 %v465, %v462
        %v496 = vpack.c.b16 %v466, %v463
        %v497 = vpack.c.b16 %v467, %v464
        %v498 = vpack.c.b16 %v471, %v468
        %v499 = vpack.c.b16 %v472, %v469
        %v500 = vpack.c.b16 %v473, %v470
        %v501 = vpack.c.b16 %v477, %v474
        %v502 = vpack.c.b16 %v478, %v475
        %v503 = vpack.c.b16 %v479, %v476
        %528 = vmatprep.subr.bf16.mxu0 %v481
        %529 = vmatpush1.bf16.msra.mxu0 %v480
        %530 = vmatprep.subr.bf16.mxu0 %v484
        %531 = vmatpush1.bf16.msra.mxu0 %v483
        %532 = vmatprep.subr.bf16.mxu0 %v487
        %533 = vmatpush1.bf16.msra.mxu0 %v486
        %534 = vmatprep.subr.bf16.mxu0 %v490
        %535 = vmatpush1.bf16.msra.mxu0 %v489
        %536 = vmatprep.subr.bf16.mxu0 %v493
        %537 = vmatpush1.bf16.msra.mxu0 %v492
        %538 = vmatprep.subr.bf16.mxu0 %v496
        %539 = vmatpush1.bf16.msra.mxu0 %v495
        %540 = vmatprep.subr.bf16.mxu0 %v499
        %541 = vmatpush1.bf16.msra.mxu0 %v498
        %542 = vmatprep.subr.bf16.mxu0 %v502
        %543 = vmatpush1.bf16.msra.mxu0 %v501
        %544 = vmatprep.subr.bf16.mxu0 0
        %545 = vmatpush1.bf16.msra.mxu0 0
        %546 = vmatprep.subr.bf16.mxu0 0
        %547 = vmatpush1.bf16.msra.mxu0 0
        %548 = vmatprep.subr.bf16.mxu0 0
        %549 = vmatpush1.bf16.msra.mxu0 0
        %550 = vmatprep.subr.bf16.mxu0 0
        %551 = vmatpush1.bf16.msra.mxu0 0
        %552 = vmatprep.subr.bf16.mxu0 0
        %553 = vmatpush1.bf16.msra.mxu0 0
        %554 = vmatprep.subr.bf16.mxu0 0
        %555 = vmatpush1.bf16.msra.mxu0 0
        %556 = vmatprep.subr.bf16.mxu0 0
        %557 = vmatpush1.bf16.msra.mxu0 0
        %558 = vmatprep.subr.bf16.mxu0 0
        %559 = vmatpush1.bf16.msra.mxu0 0
        %560 = vmatprep.mubr.bf16.mxu0 0
        %561 = vmatmul.mubr.bf16.gmra.mrb[0].mxu0 %v335
        %v562 = vpop.f32.mrb[0].mxu0
        %v563 = vadd.f32 %v388, %v562
        %v564 = vpop.f32.mrb[0].mxu0
        %v565 = vadd.f32 %v392, %v564
        %v566 = vpop.f32.mrb[0].mxu0
        %v567 = vadd.f32 %v388, %v566
        %v568 = vpop.f32.mrb[0].mxu0
        %v569 = vadd.f32 %v392, %v568
        %570 = vmatprep.mubr.bf16.mxu0 0
        %571 = vmatmul.mubr.bf16.gmra.mrb[0].mxu0 %v336
        %v572 = vpop.f32.mrb[0].mxu0
        %v573 = vadd.f32 %v388, %v572
        %v574 = vpop.f32.mrb[0].mxu0
        %v575 = vadd.f32 %v392, %v574
        %v576 = vpop.f32.mrb[0].mxu0
        %v577 = vadd.f32 %v388, %v576
        %v578 = vpop.f32.mrb[0].mxu0
        %v579 = vadd.f32 %v392, %v578
        %580 = vmatprep.mubr.bf16.mxu0 0
        %581 = vmatmul.mubr.bf16.gmra.mrb[0].mxu0 %v337
        %v582 = vpop.f32.mrb[0].mxu0
        %v583 = vadd.f32 %v388, %v582
        %v584 = vpop.f32.mrb[0].mxu0
        %v585 = vadd.f32 %v392, %v584
        %v586 = vpop.f32.mrb[0].mxu0
        %v587 = vadd.f32 %v388, %v586
        %v588 = vpop.f32.mrb[0].mxu0
        %v589 = vadd.f32 %v392, %v588
        %590 = vmatprep.mubr.bf16.mxu0 0
        %591 = vmatmul.mubr.bf16.gmra.mrb[0].mxu0 %v338
        %v592 = vpop.f32.mrb[0].mxu0
        %v593 = vadd.f32 %v388, %v592
        %v594 = vpop.f32.mrb[0].mxu0
        %v595 = vadd.f32 %v392, %v594
        %v596 = vpop.f32.mrb[0].mxu0
        %v597 = vadd.f32 %v388, %v596
        %v598 = vpop.f32.mrb[0].mxu0
        %v599 = vadd.f32 %v392, %v598
        %600 = vmatprep.mubr.bf16.mxu0 0
        %601 = vmatmul.mubr.bf16.gmra.mrb[0].mxu0 %v339
        %v602 = vpop.f32.mrb[0].mxu0
        %v603 = vadd.f32 %v388, %v602
        %v604 = vpop.f32.mrb[0].mxu0
        %v605 = vadd.f32 %v392, %v604
        %v606 = vpop.f32.mrb[0].mxu0
        %v607 = vadd.f32 %v388, %v606
        %v608 = vpop.f32.mrb[0].mxu0
        %v609 = vadd.f32 %v392, %v608
        %610 = vmatprep.mubr.bf16.mxu0 0
        %611 = vmatmul.mubr.bf16.gmra.mrb[0].mxu0 %v340
        %v612 = vpop.f32.mrb[0].mxu0
        %v613 = vadd.f32 %v388, %v612
        %v614 = vpop.f32.mrb[0].mxu0
        %v615 = vadd.f32 %v392, %v614
        %v616 = vpop.f32.mrb[0].mxu0
        %v617 = vadd.f32 %v388, %v616
        %v618 = vpop.f32.mrb[0].mxu0
        %v619 = vadd.f32 %v392, %v618
        %620 = vmatprep.mubr.bf16.mxu0 0
        %621 = vmatmul.mubr.bf16.gmra.mrb[0].mxu0 %v341
        %v622 = vpop.f32.mrb[0].mxu0
        %v623 = vadd.f32 %v388, %v622
        %v624 = vpop.f32.mrb[0].mxu0
        %v625 = vadd.f32 %v392, %v624
        %v626 = vpop.f32.mrb[0].mxu0
        %v627 = vadd.f32 %v388, %v626
        %v628 = vpop.f32.mrb[0].mxu0
        %v629 = vadd.f32 %v392, %v628
        %630 = vmatprep.mubr.bf16.mxu0 0
        %631 = vmatmul.mubr.bf16.gmra.mrb[0].mxu0 %v342
        %v632 = vpop.f32.mrb[0].mxu0
        %v633 = vadd.f32 %v388, %v632
        %v634 = vpop.f32.mrb[0].mxu0
        %v635 = vadd.f32 %v392, %v634
        %v636 = vpop.f32.mrb[0].mxu0
        %v637 = vadd.f32 %v388, %v636
        %v638 = vpop.f32.mrb[0].mxu0
        %v639 = vadd.f32 %v392, %v638
        %640 = vmatprep.mubr.bf16.mxu0 0
        %641 = vmatmul.mubr.bf16.gmra.mrb[0].mxu0 %v343
        %v642 = vpop.f32.mrb[0].mxu0
        %v643 = vadd.f32 %v388, %v642
        %v644 = vpop.f32.mrb[0].mxu0
        %v645 = vadd.f32 %v392, %v644
        %v646 = vpop.f32.mrb[0].mxu0
        %v647 = vadd.f32 %v388, %v646
        %v648 = vpop.f32.mrb[0].mxu0
        %v649 = vadd.f32 %v392, %v648
        %650 = vmatprep.mubr.bf16.mxu0 0
        %651 = vmatmul.mubr.bf16.gmra.mrb[0].mxu0 %v344
        %v652 = vpop.f32.mrb[0].mxu0
        %v653 = vadd.f32 %v388, %v652
        %v654 = vpop.f32.mrb[0].mxu0
        %v655 = vadd.f32 %v392, %v654
        %v656 = vpop.f32.mrb[0].mxu0
        %v657 = vadd.f32 %v388, %v656
        %v658 = vpop.f32.mrb[0].mxu0
        %v659 = vadd.f32 %v392, %v658
        %660 = vmatprep.mubr.bf16.mxu0 0
        %661 = vmatmul.mubr.bf16.gmra.mrb[0].mxu0 %v345
        %v662 = vpop.f32.mrb[0].mxu0
        %v663 = vadd.f32 %v388, %v662
        %v664 = vpop.f32.mrb[0].mxu0
        %v665 = vadd.f32 %v392, %v664
        %v666 = vpop.f32.mrb[0].mxu0
        %v667 = vadd.f32 %v388, %v666
        %v668 = vpop.f32.mrb[0].mxu0
        %v669 = vadd.f32 %v392, %v668
        %670 = vmatprep.mubr.bf16.mxu0 0
        %671 = vmatmul.mubr.bf16.gmra.mrb[0].mxu0 %v346
        %v672 = vpop.f32.mrb[0].mxu0
        %v673 = vadd.f32 %v388, %v672
        %v674 = vpop.f32.mrb[0].mxu0
        %v675 = vadd.f32 %v392, %v674
        %v676 = vpop.f32.mrb[0].mxu0
        %v677 = vadd.f32 %v388, %v676
        %v678 = vpop.f32.mrb[0].mxu0
        %v679 = vadd.f32 %v392, %v678
        %680 = vmatprep.mubr.bf16.mxu0 0
        %681 = vmatmul.mubr.bf16.gmra.mrb[0].mxu0 %v347
        %v682 = vpop.f32.mrb[0].mxu0
        %v683 = vadd.f32 %v388, %v682
        %v684 = vpop.f32.mrb[0].mxu0
        %v685 = vadd.f32 %v392, %v684
        %v686 = vpop.f32.mrb[0].mxu0
        %v687 = vadd.f32 %v388, %v686
        %v688 = vpop.f32.mrb[0].mxu0
        %v689 = vadd.f32 %v392, %v688
        %690 = vmatprep.mubr.bf16.mxu0 0
        %691 = vmatmul.mubr.bf16.gmra.mrb[0].mxu0 %v348
        %v692 = vpop.f32.mrb[0].mxu0
        %v693 = vadd.f32 %v388, %v692
        %v694 = vpop.f32.mrb[0].mxu0
        %v695 = vadd.f32 %v392, %v694
        %v696 = vpop.f32.mrb[0].mxu0
        %v697 = vadd.f32 %v388, %v696
        %v698 = vpop.f32.mrb[0].mxu0
        %v699 = vadd.f32 %v392, %v698
        %700 = vmatprep.mubr.bf16.mxu0 0
        %701 = vmatmul.mubr.bf16.gmra.mrb[0].mxu0 %v349
        %v702 = vpop.f32.mrb[0].mxu0
        %v703 = vadd.f32 %v388, %v702
        %v704 = vpop.f32.mrb[0].mxu0
        %v705 = vadd.f32 %v392, %v704
        %v706 = vpop.f32.mrb[0].mxu0
        %v707 = vadd.f32 %v388, %v706
        %v708 = vpop.f32.mrb[0].mxu0
        %v709 = vadd.f32 %v392, %v708
        %710 = vmatprep.mubr.bf16.mxu0 0
        %711 = vmatmul.mubr.bf16.gmra.mrb[0].mxu0 %v350
        %v712 = vpop.f32.mrb[0].mxu0
        %v713 = vadd.f32 %v388, %v712
        %v714 = vpop.f32.mrb[0].mxu0
        %v715 = vadd.f32 %v392, %v714
        %v716 = vpop.f32.mrb[0].mxu0
        %v717 = vadd.f32 %v388, %v716
        %v718 = vpop.f32.mrb[0].mxu0
        %v719 = vadd.f32 %v392, %v718
        %720 = vdwg.mxu0
        %721 = vmatprep.subr.bf16.mxu0 0
        %722 = vmatpush1.bf16.msra.mxu0 %v482
        %723 = vmatprep.subr.bf16.mxu0 0
        %724 = vmatpush1.bf16.msra.mxu0 %v485
        %725 = vmatprep.subr.bf16.mxu0 0
        %726 = vmatpush1.bf16.msra.mxu0 %v488
        %727 = vmatprep.subr.bf16.mxu0 0
        %728 = vmatpush1.bf16.msra.mxu0 %v491
        %729 = vmatprep.subr.bf16.mxu0 0
        %730 = vmatpush1.bf16.msra.mxu0 %v494
        %731 = vmatprep.subr.bf16.mxu0 0
        %732 = vmatpush1.bf16.msra.mxu0 %v497
        %733 = vmatprep.subr.bf16.mxu0 0
        %734 = vmatpush1.bf16.msra.mxu0 %v500
        %735 = vmatprep.subr.bf16.mxu0 0
        %736 = vmatpush1.bf16.msra.mxu0 %v503
        %737 = vmatprep.subr.bf16.mxu0 0
        %738 = vmatpush1.bf16.msra.mxu0 0
        %739 = vmatprep.subr.bf16.mxu0 0
        %740 = vmatpush1.bf16.msra.mxu0 0
        %741 = vmatprep.subr.bf16.mxu0 0
        %742 = vmatpush1.bf16.msra.mxu0 0
        %743 = vmatprep.subr.bf16.mxu0 0
        %744 = vmatpush1.bf16.msra.mxu0 0
        %745 = vmatprep.subr.bf16.mxu0 0
        %746 = vmatpush1.bf16.msra.mxu0 0
        %747 = vmatprep.subr.bf16.mxu0 0
        %748 = vmatpush1.bf16.msra.mxu0 0
        %749 = vmatprep.subr.bf16.mxu0 0
        %750 = vmatpush1.bf16.msra.mxu0 0
        %751 = vmatprep.subr.bf16.mxu0 0
        %752 = vmatpush1.bf16.msra.mxu0 0
        %753 = vmatprep.mubr.bf16.mxu0 0
        %754 = vmatmul.mubr.bf16.gmra.mrb[0].mxu0 %v335
        %v755 = vpop.f32.mrb[0].mxu0
        %v756 = vadd.f32 %v396, %v755
        %v757 = vpop.f32.mrb[0].mxu0
        %v758 = vpop.f32.mrb[0].mxu0
        %v759 = vadd.f32 %v396, %v758
        %v760 = vpop.f32.mrb[0].mxu0
        %761 = vmatprep.mubr.bf16.mxu0 0
        %762 = vmatmul.mubr.bf16.gmra.mrb[0].mxu0 %v336
        %v763 = vpop.f32.mrb[0].mxu0
        %v764 = vadd.f32 %v396, %v763
        %v765 = vpop.f32.mrb[0].mxu0
        %v766 = vpop.f32.mrb[0].mxu0
        %v767 = vadd.f32 %v396, %v766
        %v768 = vpop.f32.mrb[0].mxu0
        %769 = vmatprep.mubr.bf16.mxu0 0
        %770 = vmatmul.mubr.bf16.gmra.mrb[0].mxu0 %v337
        %v771 = vpop.f32.mrb[0].mxu0
        %v772 = vadd.f32 %v396, %v771
        %v773 = vpop.f32.mrb[0].mxu0
        %v774 = vpop.f32.mrb[0].mxu0
        %v775 = vadd.f32 %v396, %v774
        %v776 = vpop.f32.mrb[0].mxu0
        %777 = vmatprep.mubr.bf16.mxu0 0
        %778 = vmatmul.mubr.bf16.gmra.mrb[0].mxu0 %v338
        %v779 = vpop.f32.mrb[0].mxu0
        %v780 = vadd.f32 %v396, %v779
        %v781 = vpop.f32.mrb[0].mxu0
        %v782 = vpop.f32.mrb[0].mxu0
        %v783 = vadd.f32 %v396, %v782
        %v784 = vpop.f32.mrb[0].mxu0
        %785 = vmatprep.mubr.bf16.mxu0 0
        %786 = vmatmul.mubr.bf16.gmra.mrb[0].mxu0 %v339
        %v787 = vpop.f32.mrb[0].mxu0
        %v788 = vadd.f32 %v396, %v787
        %v789 = vpop.f32.mrb[0].mxu0
        %v790 = vpop.f32.mrb[0].mxu0
        %v791 = vadd.f32 %v396, %v790
        %v792 = vpop.f32.mrb[0].mxu0
        %793 = vmatprep.mubr.bf16.mxu0 0
        %794 = vmatmul.mubr.bf16.gmra.mrb[0].mxu0 %v340
        %v795 = vpop.f32.mrb[0].mxu0
        %v796 = vadd.f32 %v396, %v795
        %v797 = vpop.f32.mrb[0].mxu0
        %v798 = vpop.f32.mrb[0].mxu0
        %v799 = vadd.f32 %v396, %v798
        %v800 = vpop.f32.mrb[0].mxu0
        %801 = vmatprep.mubr.bf16.mxu0 0
        %802 = vmatmul.mubr.bf16.gmra.mrb[0].mxu0 %v341
        %v803 = vpop.f32.mrb[0].mxu0
        %v804 = vadd.f32 %v396, %v803
        %v805 = vpop.f32.mrb[0].mxu0
        %v806 = vpop.f32.mrb[0].mxu0
        %v807 = vadd.f32 %v396, %v806
        %v808 = vpop.f32.mrb[0].mxu0
        %809 = vmatprep.mubr.bf16.mxu0 0
        %810 = vmatmul.mubr.bf16.gmra.mrb[0].mxu0 %v342
        %v811 = vpop.f32.mrb[0].mxu0
        %v812 = vadd.f32 %v396, %v811
        %v813 = vpop.f32.mrb[0].mxu0
        %v814 = vpop.f32.mrb[0].mxu0
        %v815 = vadd.f32 %v396, %v814
        %v816 = vpop.f32.mrb[0].mxu0
        %817 = vmatprep.mubr.bf16.mxu0 0
        %818 = vmatmul.mubr.bf16.gmra.mrb[0].mxu0 %v343
        %v819 = vpop.f32.mrb[0].mxu0
        %v820 = vadd.f32 %v396, %v819
        %v821 = vpop.f32.mrb[0].mxu0
        %v822 = vpop.f32.mrb[0].mxu0
        %v823 = vadd.f32 %v396, %v822
        %v824 = vpop.f32.mrb[0].mxu0
        %825 = vmatprep.mubr.bf16.mxu0 0
        %826 = vmatmul.mubr.bf16.gmra.mrb[0].mxu0 %v344
        %v827 = vpop.f32.mrb[0].mxu0
        %v828 = vadd.f32 %v396, %v827
        %v829 = vpop.f32.mrb[0].mxu0
        %v830 = vpop.f32.mrb[0].mxu0
        %v831 = vadd.f32 %v396, %v830
        %v832 = vpop.f32.mrb[0].mxu0
        %833 = vmatprep.mubr.bf16.mxu0 0
        %834 = vmatmul.mubr.bf16.gmra.mrb[0].mxu0 %v345
        %v835 = vpop.f32.mrb[0].mxu0
        %v836 = vadd.f32 %v396, %v835
        %v837 = vpop.f32.mrb[0].mxu0
        %v838 = vpop.f32.mrb[0].mxu0
        %v839 = vadd.f32 %v396, %v838
        %v840 = vpop.f32.mrb[0].mxu0
        %841 = vmatprep.mubr.bf16.mxu0 0
        %842 = vmatmul.mubr.bf16.gmra.mrb[0].mxu0 %v346
        %v843 = vpop.f32.mrb[0].mxu0
        %v844 = vadd.f32 %v396, %v843
        %v845 = vpop.f32.mrb[0].mxu0
        %v846 = vpop.f32.mrb[0].mxu0
        %v847 = vadd.f32 %v396, %v846
        %v848 = vpop.f32.mrb[0].mxu0
        %849 = vmatprep.mubr.bf16.mxu0 0
        %850 = vmatmul.mubr.bf16.gmra.mrb[0].mxu0 %v347
        %v851 = vpop.f32.mrb[0].mxu0
        %v852 = vadd.f32 %v396, %v851
        %v853 = vpop.f32.mrb[0].mxu0
        %v854 = vpop.f32.mrb[0].mxu0
        %v855 = vadd.f32 %v396, %v854
        %v856 = vpop.f32.mrb[0].mxu0
        %857 = vmatprep.mubr.bf16.mxu0 0
        %858 = vmatmul.mubr.bf16.gmra.mrb[0].mxu0 %v348
        %v859 = vpop.f32.mrb[0].mxu0
        %v860 = vadd.f32 %v396, %v859
        %v861 = vpop.f32.mrb[0].mxu0
        %v862 = vpop.f32.mrb[0].mxu0
        %v863 = vadd.f32 %v396, %v862
        %v864 = vpop.f32.mrb[0].mxu0
        %865 = vmatprep.mubr.bf16.mxu0 0
        %866 = vmatmul.mubr.bf16.gmra.mrb[0].mxu0 %v349
        %v867 = vpop.f32.mrb[0].mxu0
        %v868 = vadd.f32 %v396, %v867
        %v869 = vpop.f32.mrb[0].mxu0
        %v870 = vpop.f32.mrb[0].mxu0
        %v871 = vadd.f32 %v396, %v870
        %v872 = vpop.f32.mrb[0].mxu0
        %873 = vmatprep.mubr.bf16.mxu0 0
        %874 = vmatmul.mubr.bf16.gmra.mrb[0].mxu0 %v350
        %v875 = vpop.f32.mrb[0].mxu0
        %v876 = vadd.f32 %v396, %v875
        %v877 = vpop.f32.mrb[0].mxu0
        %v878 = vpop.f32.mrb[0].mxu0
        %v879 = vadd.f32 %v396, %v878
        %v880 = vpop.f32.mrb[0].mxu0
        %881 = vdwg.mxu0
        %v882 = vmul.f32 %v563, 0.17677669
        %v883 = vmul.f32 %v567, 0.17677669
        %v884 = vmul.f32 %v573, 0.17677669
        %v885 = vmul.f32 %v577, 0.17677669
        %v886 = vmul.f32 %v583, 0.17677669
        %v887 = vmul.f32 %v587, 0.17677669
        %v888 = vmul.f32 %v593, 0.17677669
        %v889 = vmul.f32 %v597, 0.17677669
        %v890 = vmul.f32 %v603, 0.17677669
        %v891 = vmul.f32 %v607, 0.17677669
        %v892 = vmul.f32 %v613, 0.17677669
        %v893 = vmul.f32 %v617, 0.17677669
        %v894 = vmul.f32 %v623, 0.17677669
        %v895 = vmul.f32 %v627, 0.17677669
        %v896 = vmul.f32 %v633, 0.17677669
        %v897 = vmul.f32 %v637, 0.17677669
        %v898 = vmul.f32 %v643, 0.17677669
        %v899 = vmul.f32 %v647, 0.17677669
        %v900 = vmul.f32 %v653, 0.17677669
        %v901 = vmul.f32 %v657, 0.17677669
        %v902 = vmul.f32 %v663, 0.17677669
        %v903 = vmul.f32 %v667, 0.17677669
        %v904 = vmul.f32 %v673, 0.17677669
        %v905 = vmul.f32 %v677, 0.17677669
        %v906 = vmul.f32 %v683, 0.17677669
        %v907 = vmul.f32 %v687, 0.17677669
        %v908 = vmul.f32 %v693, 0.17677669
        %v909 = vmul.f32 %v697, 0.17677669
        %v910 = vmul.f32 %v703, 0.17677669
        %v911 = vmul.f32 %v707, 0.17677669
        %v912 = vmul.f32 %v713, 0.17677669
        %v913 = vmul.f32 %v717, 0.17677669
        %v914 = vpack.c.bf16 %v883, %v882
        %v915 = vpack.c.bf16 %v885, %v884
        %v916 = vpack.c.bf16 %v887, %v886
        %v917 = vpack.c.bf16 %v889, %v888
        %v918 = vpack.c.bf16 %v891, %v890
        %v919 = vpack.c.bf16 %v893, %v892
        %v920 = vpack.c.bf16 %v895, %v894
        %v921 = vpack.c.bf16 %v897, %v896
        %v922 = vpack.c.bf16 %v899, %v898
        %v923 = vpack.c.bf16 %v901, %v900
        %v924 = vpack.c.bf16 %v903, %v902
        %v925 = vpack.c.bf16 %v905, %v904
        %v926 = vpack.c.bf16 %v907, %v906
        %v927 = vpack.c.bf16 %v909, %v908
        %v928 = vpack.c.bf16 %v911, %v910
        %v929 = vpack.c.bf16 %v913, %v912
        %v946 = vunpack.c.l.b16 %v914
        %v947 = vunpack.c.h.b16 %v914
        %v948 = vunpack.c.l.b16 %v915
        %v949 = vunpack.c.h.b16 %v915
        %v950 = vunpack.c.l.b16 %v916
        %v951 = vunpack.c.h.b16 %v916
        %v952 = vunpack.c.l.b16 %v917
        %v953 = vunpack.c.h.b16 %v917
        %v954 = vunpack.c.l.b16 %v918
        %v955 = vunpack.c.h.b16 %v918
        %v956 = vunpack.c.l.b16 %v919
        %v957 = vunpack.c.h.b16 %v919
        %v958 = vunpack.c.l.b16 %v920
        %v959 = vunpack.c.h.b16 %v920
        %v960 = vunpack.c.l.b16 %v921
        %v961 = vunpack.c.h.b16 %v921
        %v962 = vunpack.c.l.b16 %v922
        %v963 = vunpack.c.h.b16 %v922
        %v964 = vunpack.c.l.b16 %v923
        %v965 = vunpack.c.h.b16 %v923
        %v966 = vunpack.c.l.b16 %v924
        %v967 = vunpack.c.h.b16 %v924
        %v968 = vunpack.c.l.b16 %v925
        %v969 = vunpack.c.h.b16 %v925
        %v970 = vunpack.c.l.b16 %v926
        %v971 = vunpack.c.h.b16 %v926
        %v972 = vunpack.c.l.b16 %v927
        %v973 = vunpack.c.h.b16 %v927
        %v974 = vunpack.c.l.b16 %v928
        %v975 = vunpack.c.h.b16 %v928
        %v976 = vunpack.c.l.b16 %v929
        %v977 = vunpack.c.h.b16 %v929
        %v978 = vpack.c.b16 %v946, %v946
        %v979 = vpack.c.b16 %v947, %v947
        %v980 = vpack.c.b16 %v948, %v948
        %v981 = vpack.c.b16 %v949, %v949
        %v982 = vpack.c.b16 %v950, %v950
        %v983 = vpack.c.b16 %v951, %v951
        %v984 = vpack.c.b16 %v952, %v952
        %v985 = vpack.c.b16 %v953, %v953
        %v986 = vpack.c.b16 %v954, %v954
        %v987 = vpack.c.b16 %v955, %v955
        %v988 = vpack.c.b16 %v956, %v956
        %v989 = vpack.c.b16 %v957, %v957
        %v990 = vpack.c.b16 %v958, %v958
        %v991 = vpack.c.b16 %v959, %v959
        %v992 = vpack.c.b16 %v960, %v960
        %v993 = vpack.c.b16 %v961, %v961
        %v994 = vpack.c.b16 %v962, %v962
        %v995 = vpack.c.b16 %v963, %v963
        %v996 = vpack.c.b16 %v964, %v964
        %v997 = vpack.c.b16 %v965, %v965
        %v998 = vpack.c.b16 %v966, %v966
        %v999 = vpack.c.b16 %v967, %v967
        %v1000 = vpack.c.b16 %v968, %v968
        %v1001 = vpack.c.b16 %v969, %v969
        %v1002 = vpack.c.b16 %v970, %v970
        %v1003 = vpack.c.b16 %v971, %v971
        %v1004 = vpack.c.b16 %v972, %v972
        %v1005 = vpack.c.b16 %v973, %v973
        %v1006 = vpack.c.b16 %v974, %v974
        %v1007 = vpack.c.b16 %v975, %v975
        %v1008 = vpack.c.b16 %v976, %v976
        %v1009 = vpack.c.b16 %v977, %v977
        %1042 = vst [vmem:[%s283] sm:$0xf] %v978
        %1043 = vst [vmem:[%s283 + $0x4] sm:$0xf] %v979
        %1044 = vst [vmem:[%s283 + $0x8] sm:$0xf] %v980
        %1045 = vst [vmem:[%s283 + $0xc] sm:$0xf] %v981
        %1046 = vst [vmem:[%s283 + $0x10] sm:$0xf] %v982
        %1047 = vst [vmem:[%s283 + $0x14] sm:$0xf] %v983
        %1048 = vst [vmem:[%s283 + $0x18] sm:$0xf] %v984
        %1049 = vst [vmem:[%s283 + $0x1c] sm:$0xf] %v985
        %1050 = vst [vmem:[%s283 + $0x20] sm:$0xf] %v986
        %1051 = vst [vmem:[%s283 + $0x24] sm:$0xf] %v987
        %1052 = vst [vmem:[%s283 + $0x28] sm:$0xf] %v988
        %1053 = vst [vmem:[%s283 + $0x2c] sm:$0xf] %v989
        %1054 = vst [vmem:[%s283 + $0x30] sm:$0xf] %v990
        %1055 = vst [vmem:[%s283 + $0x34] sm:$0xf] %v991
        %1056 = vst [vmem:[%s283 + $0x38] sm:$0xf] %v992
        %1057 = vst [vmem:[%s283 + $0x3c] sm:$0xf] %v993
        %1058 = vst [vmem:[%s283 + $0x40] sm:$0xf] %v994
        %1059 = vst [vmem:[%s283 + $0x44] sm:$0xf] %v995
        %1060 = vst [vmem:[%s283 + $0x48] sm:$0xf] %v996
        %1061 = vst [vmem:[%s283 + $0x4c] sm:$0xf] %v997
        %1062 = vst [vmem:[%s283 + $0x50] sm:$0xf] %v998
        %1063 = vst [vmem:[%s283 + $0x54] sm:$0xf] %v999
        %1064 = vst [vmem:[%s283 + $0x58] sm:$0xf] %v1000
        %1065 = vst [vmem:[%s283 + $0x5c] sm:$0xf] %v1001
        %1066 = vst [vmem:[%s283 + $0x60] sm:$0xf] %v1002
        %1067 = vst [vmem:[%s283 + $0x64] sm:$0xf] %v1003
        %1068 = vst [vmem:[%s283 + $0x68] sm:$0xf] %v1004
        %1069 = vst [vmem:[%s283 + $0x6c] sm:$0xf] %v1005
        %1070 = vst [vmem:[%s283 + $0x70] sm:$0xf] %v1006
        %1071 = vst [vmem:[%s283 + $0x74] sm:$0xf] %v1007
        %1072 = vst [vmem:[%s283 + $0x78] sm:$0xf] %v1008
        %1073 = vst [vmem:[%s283 + $0x7c] sm:$0xf] %v1009
        %v1074 = vpack.c.bf16 %v569, %v565
        %v1075 = vpack.c.bf16 %v579, %v575
        %v1076 = vpack.c.bf16 %v589, %v585
        %v1077 = vpack.c.bf16 %v599, %v595
        %v1078 = vpack.c.bf16 %v609, %v605
        %v1079 = vpack.c.bf16 %v619, %v615
        %v1080 = vpack.c.bf16 %v629, %v625
        %v1081 = vpack.c.bf16 %v639, %v635
        %v1082 = vpack.c.bf16 %v649, %v645
        %v1083 = vpack.c.bf16 %v659, %v655
        %v1084 = vpack.c.bf16 %v669, %v665
        %v1085 = vpack.c.bf16 %v679, %v675
        %v1086 = vpack.c.bf16 %v689, %v685
        %v1087 = vpack.c.bf16 %v699, %v695
        %v1088 = vpack.c.bf16 %v709, %v705
        %v1089 = vpack.c.bf16 %v719, %v715
        %v1106 = vunpack.c.l.b16 %v1074
        %v1107 = vunpack.c.h.b16 %v1074
        %v1108 = vunpack.c.l.b16 %v1075
        %v1109 = vunpack.c.h.b16 %v1075
        %v1110 = vunpack.c.l.b16 %v1076
        %v1111 = vunpack.c.h.b16 %v1076
        %v1112 = vunpack.c.l.b16 %v1077
        %v1113 = vunpack.c.h.b16 %v1077
        %v1114 = vunpack.c.l.b16 %v1078
        %v1115 = vunpack.c.h.b16 %v1078
        %v1116 = vunpack.c.l.b16 %v1079
        %v1117 = vunpack.c.h.b16 %v1079
        %v1118 = vunpack.c.l.b16 %v1080
        %v1119 = vunpack.c.h.b16 %v1080
        %v1120 = vunpack.c.l.b16 %v1081
        %v1121 = vunpack.c.h.b16 %v1081
        %v1122 = vunpack.c.l.b16 %v1082
        %v1123 = vunpack.c.h.b16 %v1082
        %v1124 = vunpack.c.l.b16 %v1083
        %v1125 = vunpack.c.h.b16 %v1083
        %v1126 = vunpack.c.l.b16 %v1084
        %v1127 = vunpack.c.h.b16 %v1084
        %v1128 = vunpack.c.l.b16 %v1085
        %v1129 = vunpack.c.h.b16 %v1085
        %v1130 = vunpack.c.l.b16 %v1086
        %v1131 = vunpack.c.h.b16 %v1086
        %v1132 = vunpack.c.l.b16 %v1087
        %v1133 = vunpack.c.h.b16 %v1087
        %v1134 = vunpack.c.l.b16 %v1088
        %v1135 = vunpack.c.h.b16 %v1088
        %v1136 = vunpack.c.l.b16 %v1089
        %v1137 = vunpack.c.h.b16 %v1089
        %v1138 = vpack.c.b16 %v1106, %v1106
        %v1139 = vpack.c.b16 %v1107, %v1107
        %v1140 = vpack.c.b16 %v1108, %v1108
        %v1141 = vpack.c.b16 %v1109, %v1109
        %v1142 = vpack.c.b16 %v1110, %v1110
        %v1143 = vpack.c.b16 %v1111, %v1111
        %v1144 = vpack.c.b16 %v1112, %v1112
        %v1145 = vpack.c.b16 %v1113, %v1113
        %v1146 = vpack.c.b16 %v1114, %v1114
        %v1147 = vpack.c.b16 %v1115, %v1115
        %v1148 = vpack.c.b16 %v1116, %v1116
        %v1149 = vpack.c.b16 %v1117, %v1117
        %v1150 = vpack.c.b16 %v1118, %v1118
        %v1151 = vpack.c.b16 %v1119, %v1119
        %v1152 = vpack.c.b16 %v1120, %v1120
        %v1153 = vpack.c.b16 %v1121, %v1121
        %v1154 = vpack.c.b16 %v1122, %v1122
        %v1155 = vpack.c.b16 %v1123, %v1123
        %v1156 = vpack.c.b16 %v1124, %v1124
        %v1157 = vpack.c.b16 %v1125, %v1125
        %v1158 = vpack.c.b16 %v1126, %v1126
        %v1159 = vpack.c.b16 %v1127, %v1127
        %v1160 = vpack.c.b16 %v1128, %v1128
        %v1161 = vpack.c.b16 %v1129, %v1129
        %v1162 = vpack.c.b16 %v1130, %v1130
        %v1163 = vpack.c.b16 %v1131, %v1131
        %v1164 = vpack.c.b16 %v1132, %v1132
        %v1165 = vpack.c.b16 %v1133, %v1133
        %v1166 = vpack.c.b16 %v1134, %v1134
        %v1167 = vpack.c.b16 %v1135, %v1135
        %v1168 = vpack.c.b16 %v1136, %v1136
        %v1169 = vpack.c.b16 %v1137, %v1137
        %1202 = vst [vmem:[%s290] sm:$0xf] %v1138
        %1203 = vst [vmem:[%s290 + $0x4] sm:$0xf] %v1139
        %1204 = vst [vmem:[%s290 + $0x8] sm:$0xf] %v1140
        %1205 = vst [vmem:[%s290 + $0xc] sm:$0xf] %v1141
        %1206 = vst [vmem:[%s290 + $0x10] sm:$0xf] %v1142
        %1207 = vst [vmem:[%s290 + $0x14] sm:$0xf] %v1143
        %1208 = vst [vmem:[%s290 + $0x18] sm:$0xf] %v1144
        %1209 = vst [vmem:[%s290 + $0x1c] sm:$0xf] %v1145
        %1210 = vst [vmem:[%s290 + $0x20] sm:$0xf] %v1146
        %1211 = vst [vmem:[%s290 + $0x24] sm:$0xf] %v1147
        %1212 = vst [vmem:[%s290 + $0x28] sm:$0xf] %v1148
        %1213 = vst [vmem:[%s290 + $0x2c] sm:$0xf] %v1149
        %1214 = vst [vmem:[%s290 + $0x30] sm:$0xf] %v1150
        %1215 = vst [vmem:[%s290 + $0x34] sm:$0xf] %v1151
        %1216 = vst [vmem:[%s290 + $0x38] sm:$0xf] %v1152
        %1217 = vst [vmem:[%s290 + $0x3c] sm:$0xf] %v1153
        %1218 = vst [vmem:[%s290 + $0x40] sm:$0xf] %v1154
        %1219 = vst [vmem:[%s290 + $0x44] sm:$0xf] %v1155
        %1220 = vst [vmem:[%s290 + $0x48] sm:$0xf] %v1156
        %1221 = vst [vmem:[%s290 + $0x4c] sm:$0xf] %v1157
        %1222 = vst [vmem:[%s290 + $0x50] sm:$0xf] %v1158
        %1223 = vst [vmem:[%s290 + $0x54] sm:$0xf] %v1159
        %1224 = vst [vmem:[%s290 + $0x58] sm:$0xf] %v1160
        %1225 = vst [vmem:[%s290 + $0x5c] sm:$0xf] %v1161
        %1226 = vst [vmem:[%s290 + $0x60] sm:$0xf] %v1162
        %1227 = vst [vmem:[%s290 + $0x64] sm:$0xf] %v1163
        %1228 = vst [vmem:[%s290 + $0x68] sm:$0xf] %v1164
        %1229 = vst [vmem:[%s290 + $0x6c] sm:$0xf] %v1165
        %1230 = vst [vmem:[%s290 + $0x70] sm:$0xf] %v1166
        %1231 = vst [vmem:[%s290 + $0x74] sm:$0xf] %v1167
        %1232 = vst [vmem:[%s290 + $0x78] sm:$0xf] %v1168
        %1233 = vst [vmem:[%s290 + $0x7c] sm:$0xf] %v1169
        %v1234 = vpack.c.bf16 %v759, %v756
        %v1235 = vpack.c.bf16 %v767, %v764
        %v1236 = vpack.c.bf16 %v775, %v772
        %v1237 = vpack.c.bf16 %v783, %v780
        %v1238 = vpack.c.bf16 %v791, %v788
        %v1239 = vpack.c.bf16 %v799, %v796
        %v1240 = vpack.c.bf16 %v807, %v804
        %v1241 = vpack.c.bf16 %v815, %v812
        %v1242 = vpack.c.bf16 %v823, %v820
        %v1243 = vpack.c.bf16 %v831, %v828
        %v1244 = vpack.c.bf16 %v839, %v836
        %v1245 = vpack.c.bf16 %v847, %v844
        %v1246 = vpack.c.bf16 %v855, %v852
        %v1247 = vpack.c.bf16 %v863, %v860
        %v1248 = vpack.c.bf16 %v871, %v868
        %v1249 = vpack.c.bf16 %v879, %v876
        %v1266 = vunpack.c.l.b16 %v1234
        %v1267 = vunpack.c.h.b16 %v1234
        %v1268 = vunpack.c.l.b16 %v1235
        %v1269 = vunpack.c.h.b16 %v1235
        %v1270 = vunpack.c.l.b16 %v1236
        %v1271 = vunpack.c.h.b16 %v1236
        %v1272 = vunpack.c.l.b16 %v1237
        %v1273 = vunpack.c.h.b16 %v1237
        %v1274 = vunpack.c.l.b16 %v1238
        %v1275 = vunpack.c.h.b16 %v1238
        %v1276 = vunpack.c.l.b16 %v1239
        %v1277 = vunpack.c.h.b16 %v1239
        %v1278 = vunpack.c.l.b16 %v1240
        %v1279 = vunpack.c.h.b16 %v1240
        %v1280 = vunpack.c.l.b16 %v1241
        %v1281 = vunpack.c.h.b16 %v1241
        %v1282 = vunpack.c.l.b16 %v1242
        %v1283 = vunpack.c.h.b16 %v1242
        %v1284 = vunpack.c.l.b16 %v1243
        %v1285 = vunpack.c.h.b16 %v1243
        %v1286 = vunpack.c.l.b16 %v1244
        %v1287 = vunpack.c.h.b16 %v1244
        %v1288 = vunpack.c.l.b16 %v1245
        %v1289 = vunpack.c.h.b16 %v1245
        %v1290 = vunpack.c.l.b16 %v1246
        %v1291 = vunpack.c.h.b16 %v1246
        %v1292 = vunpack.c.l.b16 %v1247
        %v1293 = vunpack.c.h.b16 %v1247
        %v1294 = vunpack.c.l.b16 %v1248
        %v1295 = vunpack.c.h.b16 %v1248
        %v1296 = vunpack.c.l.b16 %v1249
        %v1297 = vunpack.c.h.b16 %v1249
        %v1298 = vpack.c.b16 %v1266, %v1266
        %v1299 = vpack.c.b16 %v1267, %v1267
        %v1300 = vpack.c.b16 %v1268, %v1268
        %v1301 = vpack.c.b16 %v1269, %v1269
        %v1302 = vpack.c.b16 %v1270, %v1270
        %v1303 = vpack.c.b16 %v1271, %v1271
        %v1304 = vpack.c.b16 %v1272, %v1272
        %v1305 = vpack.c.b16 %v1273, %v1273
        %v1306 = vpack.c.b16 %v1274, %v1274
        %v1307 = vpack.c.b16 %v1275, %v1275
        %v1308 = vpack.c.b16 %v1276, %v1276
        %v1309 = vpack.c.b16 %v1277, %v1277
        %v1310 = vpack.c.b16 %v1278, %v1278
        %v1311 = vpack.c.b16 %v1279, %v1279
        %v1312 = vpack.c.b16 %v1280, %v1280
        %v1313 = vpack.c.b16 %v1281, %v1281
        %v1314 = vpack.c.b16 %v1282, %v1282
        %v1315 = vpack.c.b16 %v1283, %v1283
        %v1316 = vpack.c.b16 %v1284, %v1284
        %v1317 = vpack.c.b16 %v1285, %v1285
        %v1318 = vpack.c.b16 %v1286, %v1286
        %v1319 = vpack.c.b16 %v1287, %v1287
        %v1320 = vpack.c.b16 %v1288, %v1288
        %v1321 = vpack.c.b16 %v1289, %v1289
        %v1322 = vpack.c.b16 %v1290, %v1290
        %v1323 = vpack.c.b16 %v1291, %v1291
        %v1324 = vpack.c.b16 %v1292, %v1292
        %v1325 = vpack.c.b16 %v1293, %v1293
        %v1326 = vpack.c.b16 %v1294, %v1294
        %v1327 = vpack.c.b16 %v1295, %v1295
        %v1328 = vpack.c.b16 %v1296, %v1296
        %v1329 = vpack.c.b16 %v1297, %v1297
        %1362 = vst [vmem:[%s297] sm:$0xf] %v1298
        %1363 = vst [vmem:[%s297 + $0x4] sm:$0xf] %v1299
        %1364 = vst [vmem:[%s297 + $0x8] sm:$0xf] %v1300
        %1365 = vst [vmem:[%s297 + $0xc] sm:$0xf] %v1301
        %1366 = vst [vmem:[%s297 + $0x10] sm:$0xf] %v1302
        %1367 = vst [vmem:[%s297 + $0x14] sm:$0xf] %v1303
        %1368 = vst [vmem:[%s297 + $0x18] sm:$0xf] %v1304
        %1369 = vst [vmem:[%s297 + $0x1c] sm:$0xf] %v1305
        %1370 = vst [vmem:[%s297 + $0x20] sm:$0xf] %v1306
        %1371 = vst [vmem:[%s297 + $0x24] sm:$0xf] %v1307
        %1372 = vst [vmem:[%s297 + $0x28] sm:$0xf] %v1308
        %1373 = vst [vmem:[%s297 + $0x2c] sm:$0xf] %v1309
        %1374 = vst [vmem:[%s297 + $0x30] sm:$0xf] %v1310
        %1375 = vst [vmem:[%s297 + $0x34] sm:$0xf] %v1311
        %1376 = vst [vmem:[%s297 + $0x38] sm:$0xf] %v1312
        %1377 = vst [vmem:[%s297 + $0x3c] sm:$0xf] %v1313
        %1378 = vst [vmem:[%s297 + $0x40] sm:$0xf] %v1314
        %1379 = vst [vmem:[%s297 + $0x44] sm:$0xf] %v1315
        %1380 = vst [vmem:[%s297 + $0x48] sm:$0xf] %v1316
        %1381 = vst [vmem:[%s297 + $0x4c] sm:$0xf] %v1317
        %1382 = vst [vmem:[%s297 + $0x50] sm:$0xf] %v1318
        %1383 = vst [vmem:[%s297 + $0x54] sm:$0xf] %v1319
        %1384 = vst [vmem:[%s297 + $0x58] sm:$0xf] %v1320
        %1385 = vst [vmem:[%s297 + $0x5c] sm:$0xf] %v1321
        %1386 = vst [vmem:[%s297 + $0x60] sm:$0xf] %v1322
        %1387 = vst [vmem:[%s297 + $0x64] sm:$0xf] %v1323
        %1388 = vst [vmem:[%s297 + $0x68] sm:$0xf] %v1324
        %1389 = vst [vmem:[%s297 + $0x6c] sm:$0xf] %v1325
        %1390 = vst [vmem:[%s297 + $0x70] sm:$0xf] %v1326
        %1391 = vst [vmem:[%s297 + $0x74] sm:$0xf] %v1327
        %1392 = vst [vmem:[%s297 + $0x78] sm:$0xf] %v1328
        %1393 = vst [vmem:[%s297 + $0x7c] sm:$0xf] %v1329
        %s1394 = sand.u32 %s119, 1
        %s1395 = scalar_lea.sflag [#allocation4], %s1394
        %s1396 = sand.u32 %s119, 1
        %s1397 = smul.addr %s1396, 128
        %s1398 = scalar_lea.vmem [#allocation7], %s1397
        %s1399 = sand.u32 %s27, 1
        %s1400 = scalar_lea.sflag [#allocation9], %s1399
        %s1401 = sand.u32 %s147, 1
        %s1402 = smul.addr %s1401, 128
        %s1403 = scalar_lea.vmem [#allocation8], %s1402
        %s1404 = sand.u32 %s27, 1
        %s1405 = scalar_lea.sflag [#allocation9], %s1404
        %s1406 = sand.u32 %s175, 1
        %s1407 = smul.addr %s1406, 128
        %s1408 = scalar_lea.vmem [#allocation10], %s1407
        // Predicated region
        $region41: #{tpu_custom_call.1} parent=31 // pred_check
          %p1409 = pneg %p129
        $region42: #{tpu_custom_call.1} parent=31 // pred_check_branch
          %1411 = sbr.rel (%p1409) target = $region44
        $region43: #{tpu_custom_call.1} parent=31 // pred_region
          %s1412 = smul.u32 32, %s32
          %s1414 = ssub.s32 2048, 2048
          %1415 = vsyncadd %s1395, %s1414
          %s1416 = smul.addr %s31, 32
          %s1417 = sadd.s32 %s1412, %s1416
          %s1418 = smul.addr %s1417, 64
          %s1419 = scalar_lea.hbm %s3, %s1418
          %s1420 = sshll.u32 %s1398, 4
          %s1421 = int_to_ptr.vmem [resolvable:$true] %s1420
          %1426 = dma.vmem_to_hbm [thread:$0]  %s1421, 2048, %s1419, %s1395, 64, 64, 4
        $region44: #{tpu_custom_call.1} parent=31 // pred_fallthru
          _
        // Predicated region
        $region45: #{tpu_custom_call.1} parent=31 // pred_check
          %p1427 = pneg %p157
        $region46: #{tpu_custom_call.1} parent=31 // pred_check_branch
          %1429 = sbr.rel (%p1427) target = $region48
        $region47: #{tpu_custom_call.1} parent=31 // pred_region
          %s1430 = smul.u32 32, %s32
          %s1432 = ssub.s32 2048, 2048
          %1433 = vsyncadd %s1400, %s1432
          %s1434 = smul.addr %s31, 32
          %s1435 = sadd.s32 %s1430, %s1434
          %s1436 = smul.addr %s1435, 64
          %s1437 = scalar_lea.hbm %s4, %s1436
          %s1438 = sshll.u32 %s1403, 4
          %s1439 = int_to_ptr.vmem [resolvable:$true] %s1438
          %1444 = dma.vmem_to_hbm [thread:$0]  %s1439, 2048, %s1437, %s1400, 64, 64, 4
        $region48: #{tpu_custom_call.1} parent=31 // pred_fallthru
          _
        // Predicated region
        $region49: #{tpu_custom_call.1} parent=31 // pred_check
          %p1445 = pneg %p185
        $region50: #{tpu_custom_call.1} parent=31 // pred_check_branch
          %1447 = sbr.rel (%p1445) target = $region52
        $region51: #{tpu_custom_call.1} parent=31 // pred_region
          %s1448 = smul.u32 32, %s32
          %s1450 = ssub.s32 2048, 2048
          %1451 = vsyncadd %s1405, %s1450
          %s1452 = smul.addr %s31, 32
          %s1453 = sadd.s32 %s1448, %s1452
          %s1454 = smul.addr %s1453, 64
          %s1455 = scalar_lea.hbm %s5, %s1454
          %s1456 = sshll.u32 %s1408, 4
          %s1457 = int_to_ptr.vmem [resolvable:$true] %s1456
          %1462 = dma.vmem_to_hbm [thread:$0]  %s1457, 2048, %s1455, %s1405, 64, 64, 4
        $region52: #{tpu_custom_call.1} parent=31 // pred_fallthru
          _
      $region32: #{tpu_custom_call.1} parent=5 // pred_fallthru
        _
      %p1463 = scmp.le.s32.totalorder 2, %s22
      // Predicated region
      $region53: #{tpu_custom_call.1} parent=5 // pred_check
        %p1464 = pneg %p1463
      $region54: #{tpu_custom_call.1} parent=5 // pred_check_branch
        %1466 = sbr.rel (%p1464) target = $region56
      $region55: #{tpu_custom_call.1} parent=5 // pred_region
        %s1467 = ssub.s32 %s22, 2
        // Predicated region
        $region57: #{tpu_custom_call.1} parent=55 // pred_check
          %p1468 = pneg %p135
        $region58: #{tpu_custom_call.1} parent=55 // pred_check_branch
          %1470 = sbr.rel (%p1468) target = $region60
        $region59: #{tpu_custom_call.1} parent=55 // pred_region
          %s1471 = sand.u32 %s120, 1
          %s1472 = scalar_lea.sflag [#allocation4], %s1471
          %s1473 = sand.u32 %s120, 1
          %s1474 = smul.addr %s1473, 128
          %s1475 = scalar_lea.vmem [#allocation7], %s1474
          %1476 = dma.done %s1472, 2048
        $region60: #{tpu_custom_call.1} parent=55 // pred_fallthru
          _
        // Predicated region
        $region61: #{tpu_custom_call.1} parent=55 // pred_check
          %p1477 = pneg %p163
        $region62: #{tpu_custom_call.1} parent=55 // pred_check_branch
          %1479 = sbr.rel (%p1477) target = $region64
        $region63: #{tpu_custom_call.1} parent=55 // pred_region
          %s1480 = sand.u32 %s28, 1
          %s1481 = scalar_lea.sflag [#allocation9], %s1480
          %s1482 = sand.u32 %s148, 1
          %s1483 = smul.addr %s1482, 128
          %s1484 = scalar_lea.vmem [#allocation8], %s1483
          %1485 = dma.done %s1481, 2048
        $region64: #{tpu_custom_call.1} parent=55 // pred_fallthru
          _
        // Predicated region
        $region65: #{tpu_custom_call.1} parent=55 // pred_check
          %p1486 = pneg %p191
        $region66: #{tpu_custom_call.1} parent=55 // pred_check_branch
          %1488 = sbr.rel (%p1486) target = $region68
        $region67: #{tpu_custom_call.1} parent=55 // pred_region
          %s1489 = sand.u32 %s28, 1
          %s1490 = scalar_lea.sflag [#allocation9], %s1489
          %s1491 = sand.u32 %s176, 1
          %s1492 = smul.addr %s1491, 128
          %s1493 = scalar_lea.vmem [#allocation10], %s1492
          %1494 = dma.done %s1490, 2048
        $region68: #{tpu_custom_call.1} parent=55 // pred_fallthru
          _
      $region56: #{tpu_custom_call.1} parent=5 // pred_fallthru
        _
    $region6: #{tpu_custom_call.1} parent=1 // loop_footer
      %s26 = sadd.s32 1, %s22
    $region7: #{tpu_custom_call.1} parent=1 // loop_footer_branch
      %21 = sbr.rel target = $region3
    $region8: #{tpu_custom_call.1} parent=1 // loop_exit
      _
    %1495 = vsyncpa [#allocation3], 1
    %s1496 = scalar_lea.sflag [#allocation3], 1
    %1497 = vsyncpa %s1496, 1
    %1498 = vsyncpa [#allocation6], 1
    %1499 = vsyncpa [#allocation4], 1
    %s1500 = scalar_lea.sflag [#allocation4], 1
    %1501 = vsyncpa %s1500, 1
    %1502 = vsyncpa [#allocation9], 1
    %s1503 = scalar_lea.sflag [#allocation9], 1
    %1504 = vsyncpa %s1503, 1

</llo_original>
